<compile_context>
chip_gen: v6e
topology: v6e:2x2x1
jax: 0.10.0
libtpu: 0.0.40
codegen_flags: <defaults>
</compile_context>

<pallas_src>
import functools

import jax
import jax.numpy as jnp
from jax import lax
from jax.experimental import pallas as pl
from jax.experimental.pallas import tpu as pltpu

BN_EPS = 1e-5
MAX_ROWS = 512        # output rows per tile (memory-bound sweet spot)


def _round_up(x, m):
    return (x + m - 1) // m * m


# --------------------------------------------------------------------------
# TemporalBlock: Conv1d -> BatchNorm1d(eval) -> ReLU  (channel-last layout)
# --------------------------------------------------------------------------
def _conv_bn_relu_kernel(a_ref, w_ref, s_ref, o_ref, *, K, TL, stride):
    """relu(conv1d(a) with BN folded) for one (batch, length-tile) block.

    a_ref : (1, 1, W_in, C_in)     halo'd activation tile (compute dtype)
    w_ref : (K, C_in, C_out_pad)   BN-folded conv weights (compute dtype)
    s_ref : (1, C_out_pad)         BN-folded shift (f32)
    o_ref : (1, TL, C_out_pad)
    """
    acc = None
    for k in range(K):                              # K small & static -> unrolled
        if stride == 1:
            a_k = a_ref[0, 0, pl.ds(k, TL), :]
        else:
            a_k = a_ref[0, 0, pl.ds(k, TL, stride=stride), :]
        part = jnp.dot(a_k, w_ref[k], preferred_element_type=jnp.float32)
        acc = part if acc is None else acc + part
    y = acc + s_ref[...]
    o_ref[0] = jnp.maximum(y, 0.0).astype(o_ref.dtype)


def conv1d_bn_relu(x, conv_w, conv_b, bn_gamma, bn_beta, bn_mean, bn_var, *,
                   stride=1, padding=0, compute_dtype=jnp.float32):
    """x: (N, L, C_in) channel-last; conv_w: (C_out, C_in, K) -> (N, L_out, C_out)."""
    N, L, C_in = x.shape
    C_out, _, K = conv_w.shape
    L_out = (L + 2 * padding - K) // stride + 1
    assert L_out > 0

    # Fold conv bias + eval-mode BN into scale / shift.
    scale = bn_gamma * lax.rsqrt(bn_var + BN_EPS)              # (C_out,)
    shift = bn_beta + (conv_b - bn_mean) * scale               # (C_out,)
    w = conv_w * scale[:, None, None]                          # (C_out, C_in, K)
    w = jnp.transpose(w, (2, 1, 0))                            # (K, C_in, C_out)

    # Lane-dense output: pad C_out to a multiple of 128.
    C_out_pad = _round_up(C_out, 128)
    if C_out_pad != C_out:
        w = jnp.pad(w, ((0, 0), (0, 0), (0, C_out_pad - C_out)))
        shift = jnp.pad(shift, (0, C_out_pad - C_out))
    w = w.astype(compute_dtype)
    shift = shift.reshape(1, C_out_pad).astype(jnp.float32)

    # Tiling along the output-length axis.
    TL = min(MAX_ROWS, _round_up(L_out, 8))
    num_tiles = pl.cdiv(L_out, TL)
    M_pad = num_tiles * TL
    W_in = (TL - 1) * stride + K

    # Halo'd activation tiles: (N, num_tiles, W_in, C_in); only K-1 rows of
    # overlap per tile (vs. K-times im2col duplication).
    L_need = (num_tiles - 1) * TL * stride + W_in
    pad_hi = max(L_need - (L + padding), 0)
    x_t = jnp.pad(x, ((0, 0), (padding, pad_hi), (0, 0)))
    starts = (jnp.arange(num_tiles) * (TL * stride))[:, None] \
        + jnp.arange(W_in)[None, :]                            # (num_tiles, W_in)
    x_halo = x_t[:, starts, :].astype(compute_dtype)           # (N, T, W_in, C_in)

    kernel = functools.partial(_conv_bn_relu_kernel, K=K, TL=TL, stride=stride)

    out = pl.pallas_call(
        kernel,
        out_shape=jax.ShapeDtypeStruct((N, M_pad, C_out_pad), x.dtype),
        grid_spec=pltpu.PrefetchScalarGridSpec(
            num_scalar_prefetch=0,
            grid=(N, num_tiles),
            in_specs=[
                pl.BlockSpec((1, 1, W_in, C_in), lambda n, t: (n, t, 0, 0)),
                pl.BlockSpec((K, C_in, C_out_pad), lambda n, t: (0, 0, 0)),
                pl.BlockSpec((1, C_out_pad), lambda n, t: (0, 0)),
            ],
            out_specs=pl.BlockSpec((1, TL, C_out_pad), lambda n, t: (n, t, 0)),
        ),
        compiler_params=pltpu.CompilerParams(
            dimension_semantics=("parallel", "parallel"),
            vmem_limit_bytes=64 * 1024 * 1024),
    )(x_halo, w, shift)

    return out[:, :L_out, :C_out]


# --------------------------------------------------------------------------
# MaxPool1d(kernel_size=2, stride=2, padding=1)  (channel-last layout)
# --------------------------------------------------------------------------
def _maxpool2_kernel(a_ref, b_ref, o_ref):
    o_ref[...] = jnp.maximum(a_ref[...], b_ref[...])


def maxpool1d_k2s2p1(x):
    """x: (N, L, C) -> (N, L//2 + 1, C); PyTorch MaxPool1d(2, 2, padding=1)."""
    N, L, C = x.shape
    L_pool = L // 2 + 1
    total = 2 * L_pool
    # Window padding uses -inf (PyTorch pads max-pool with -inf implicitly).
    x_pad = jnp.pad(x, ((0, 0), (1, total - 1 - L), (0, 0)),
                    constant_values=-jnp.inf)
    even = x_pad[:, 0::2, :]                       # (N, L_pool, C)
    odd = x_pad[:, 1::2, :]                        # (N, L_pool, C)

    TP = min(MAX_ROWS, _round_up(L_pool, 8))
    num_tiles = pl.cdiv(L_pool, TP)
    Lp_pad = num_tiles * TP
    if Lp_pad != L_pool:
        even = jnp.pad(even, ((0, 0), (0, Lp_pad - L_pool), (0, 0)))
        odd = jnp.pad(odd, ((0, 0), (0, Lp_pad - L_pool), (0, 0)))

    out = pl.pallas_call(
        _maxpool2_kernel,
        out_shape=jax.ShapeDtypeStruct((N, Lp_pad, C), x.dtype),
        grid_spec=pltpu.PrefetchScalarGridSpec(
            num_scalar_prefetch=0,
            grid=(N, num_tiles),
            in_specs=[pl.BlockSpec((1, TP, C), lambda n, t: (n, t, 0)),
                      pl.BlockSpec((1, TP, C), lambda n, t: (n, t, 0))],
            out_specs=pl.BlockSpec((1, TP, C), lambda n, t: (n, t, 0)),
        ),
        compiler_params=pltpu.CompilerParams(
            dimension_semantics=("parallel", "parallel")),
    )(even, odd)
    return out[:, :L_pool, :]


# --------------------------------------------------------------------------
# IntermediateBlock: Linear -> MaskedNorm('sync_batch', eval) -> ReLU
# (eval-mode MaskedNorm == BatchNorm with running stats; mask is unused)
# --------------------------------------------------------------------------
def _linear_bn_relu_kernel(a_ref, w_ref, s_ref, o_ref):
    acc = jnp.dot(a_ref[...], w_ref[...], preferred_element_type=jnp.float32)
    o_ref[...] = jnp.maximum(acc + s_ref[...], 0.0).astype(o_ref.dtype)


def linear_bn_relu(x, fc_w, fc_b, bn_gamma, bn_beta, bn_mean, bn_var, *,
                   compute_dtype=jnp.float32):
    """x: (N, T, C_in); fc_w: (C_out, C_in) -> (N, T, C_out)."""
    N, T, C_in = x.shape
    C_out = fc_w.shape[0]

    scale = bn_gamma * lax.rsqrt(bn_var + BN_EPS)
    shift = bn_beta + (fc_b - bn_mean) * scale
    w = (fc_w * scale[:, None]).T                              # (C_in, C_out)

    C_out_pad = _round_up(C_out, 128)
    if C_out_pad != C_out:
        w = jnp.pad(w, ((0, 0), (0, C_out_pad - C_out)))
        shift = jnp.pad(shift, (0, C_out_pad - C_out))
    w = w.astype(compute_dtype)
    shift = shift.reshape(1, C_out_pad).astype(jnp.float32)

    R = N * T
    TR = min(MAX_ROWS, _round_up(R, 8))
    num_tiles = pl.cdiv(R, TR)
    R_pad = num_tiles * TR
    a = x.reshape(R, C_in)
    if R_pad != R:
        a = jnp.pad(a, ((0, R_pad - R), (0, 0)))
    a = a.astype(compute_dtype)

    out = pl.pallas_call(
        _linear_bn_relu_kernel,
        out_shape=jax.ShapeDtypeStruct((R_pad, C_out_pad), x.dtype),
        grid_spec=pltpu.PrefetchScalarGridSpec(
            num_scalar_prefetch=0,
            grid=(num_tiles,),
            in_specs=[pl.BlockSpec((TR, C_in), lambda i: (i, 0)),
                      pl.BlockSpec((C_in, C_out_pad), lambda i: (0, 0)),
                      pl.BlockSpec((1, C_out_pad), lambda i: (0, 0))],
            out_specs=pl.BlockSpec((TR, C_out_pad), lambda i: (i, 0)),
        ),
        compiler_params=pltpu.CompilerParams(
            dimension_semantics=("parallel",),
            vmem_limit_bytes=64 * 1024 * 1024),
    )(a, w, shift)
    return out[:R, :C_out].reshape(N, T, C_out)


# --------------------------------------------------------------------------
# gloss_output_layer + log_softmax + softmax (fused matmul + epilogue)
# --------------------------------------------------------------------------
def _gloss_head_kernel(a_ref, w_ref, b_ref, logit_ref, logp_ref, p_ref, *,
                       cls_num):
    logits = jnp.dot(a_ref[...], w_ref[...],
                     preferred_element_type=jnp.float32) + b_ref[...]
    lane = lax.broadcasted_iota(jnp.int32, logits.shape, 1)
    masked = jnp.where(lane < cls_num, logits, jnp.float32(-1e30))
    m = jnp.max(masked, axis=-1, keepdims=True)
    e = jnp.exp(masked - m)
    s = jnp.sum(e, axis=-1, keepdims=True)
    logp = masked - m - jnp.log(s)
    probs = e / s
    logit_ref[...] = logits.astype(logit_ref.dtype)
    logp_ref[...] = logp.astype(logp_ref.dtype)
    p_ref[...] = probs.astype(p_ref.dtype)


def gloss_head(x, w, b, *, compute_dtype=jnp.float32):
    """x: (N, T, C_in); w: (cls, C_in) -> (logits, log_probs, probs), each (N, T, cls)."""
    N, T, C_in = x.shape
    cls_num = w.shape[0]
    wt = w.T                                                   # (C_in, cls)
    bias = b
    C_pad = _round_up(cls_num, 128)
    if C_pad != cls_num:
        wt = jnp.pad(wt, ((0, 0), (0, C_pad - cls_num)))
        bias = jnp.pad(bias, (0, C_pad - cls_num))
    wt = wt.astype(compute_dtype)
    bias = bias.reshape(1, C_pad).astype(jnp.float32)

    R = N * T
    TR = min(MAX_ROWS, _round_up(R, 8))
    num_tiles = pl.cdiv(R, TR)
    R_pad = num_tiles * TR
    a = x.reshape(R, C_in)
    if R_pad != R:
        a = jnp.pad(a, ((0, R_pad - R), (0, 0)))
    a = a.astype(compute_dtype)

    kernel = functools.partial(_gloss_head_kernel, cls_num=cls_num)
    out_sd = jax.ShapeDtypeStruct((R_pad, C_pad), x.dtype)
    row_spec = pl.BlockSpec((TR, C_pad), lambda i: (i, 0))

    logits, logp, probs = pl.pallas_call(
        kernel,
        out_shape=(out_sd, out_sd, out_sd),
        grid_spec=pltpu.PrefetchScalarGridSpec(
            num_scalar_prefetch=0,
            grid=(num_tiles,),
            in_specs=[pl.BlockSpec((TR, C_in), lambda i: (i, 0)),
                      pl.BlockSpec((C_in, C_pad), lambda i: (0, 0)),
                      pl.BlockSpec((1, C_pad), lambda i: (0, 0))],
            out_specs=[row_spec, row_spec, row_spec],
        ),
        compiler_params=pltpu.CompilerParams(
            dimension_semantics=("parallel",),
            vmem_limit_bytes=64 * 1024 * 1024),
    )(a, wt, bias)

    def _crop(y):
        return y[:R, :cls_num].reshape(N, T, cls_num)

    return _crop(logits), _crop(logp), _crop(probs)


# --------------------------------------------------------------------------
# Full VisualHeadNew forward (eval mode)
# --------------------------------------------------------------------------
def visual_head_new_forward(x, valid_len_in, params, *,
                            compute_dtype=jnp.float32):
    """x: (B, Tin, D) channel-last, valid_len_in: (B,) int."""
    B, Tin, D = x.shape
    h = x
    for blk in params["temporal_blocks"]:
        h = conv1d_bn_relu(h, blk["conv_w"], blk["conv_b"], blk["bn_gamma"],
                           blk["bn_beta"], blk["bn_mean"], blk["bn_var"],
                           stride=1, padding=2, compute_dtype=compute_dtype)
        h = maxpool1d_k2s2p1(h)
    Tout = h.shape[1]

    valid_len_out = jnp.floor(
        valid_len_in.astype(jnp.float32) * Tout / Tin).astype(jnp.int32)
    # Per-batch downsampled mask (unused by eval-mode MaskedNorm).
    mask = jnp.arange(Tout)[None, None, :] < valid_len_out[:, None, None]

    feat = linear_bn_relu(h, params["fc_w"], params["fc_b"],
                          params["fc_bn_gamma"], params["fc_bn_beta"],
                          params["fc_bn_mean"], params["fc_bn_var"],
                          compute_dtype=compute_dtype)

    # TODO(synk): TransformerEncoder not ported (external dep); identity here.
    logits, logp, probs = gloss_head(feat, params["gloss_w"], params["gloss_b"],
                                     compute_dtype=compute_dtype)
    return {"gloss_feature": feat,
            "gloss_logits": logits,
            "gloss_probabilities_log": logp,
            "gloss_probabilities": probs,
            "valid_len_out": valid_len_out,
            "mask": mask}


# --------------------------------------------------------------------------
# Pure-JAX reference
# --------------------------------------------------------------------------
def _reference_forward(x, valid_len_in, params):
    B, Tin, D = x.shape
    h = jnp.transpose(x, (0, 2, 1))                            # (B, D, Tin) NCL
    for blk in params["temporal_blocks"]:
        y = lax.conv_general_dilated(h, blk["conv_w"], (1,), [(2, 2)],
                                     dimension_numbers=("NCH", "OIH", "NCH"))
        y = y + blk["conv_b"][None, :, None]
        inv = lax.rsqrt(blk["bn_var"] + BN_EPS)
        y = (y - blk["bn_mean"][None, :, None]) \
            * (inv * blk["bn_gamma"])[None, :, None] + blk["bn_beta"][None, :, None]
        y = jnp.maximum(y, 0.0)
        h = lax.reduce_window(y, -jnp.inf, lax.max, (1, 1, 2), (1, 1, 2),
                              [(0, 0), (0, 0), (1, 1)])
    h = jnp.transpose(h, (0, 2, 1))                            # (B, Tout, C)
    Tout = h.shape[1]
    valid_len_out = jnp.floor(
        valid_len_in.astype(jnp.float32) * Tout / Tin).astype(jnp.int32)

    z = h @ params["fc_w"].T + params["fc_b"]
    inv = lax.rsqrt(params["fc_bn_var"] + BN_EPS)
    z = (z - params["fc_bn_mean"]) * (inv * params["fc_bn_gamma"]) \
        + params["fc_bn_beta"]
    feat = jnp.maximum(z, 0.0)

    logits = feat @ params["gloss_w"].T + params["gloss_b"]
    return {"gloss_feature": feat,
            "gloss_logits": logits,
            "gloss_probabilities_log": jax.nn.log_softmax(logits, axis=-1),
            "gloss_probabilities": jax.nn.softmax(logits, axis=-1),
            "valid_len_out": valid_len_out}


if __name__ == "__main__":
    # Small shapes consistent with VisualHeadNew (temporal_block_layers=1).
    B, Tin, D = 2, 16, 4          # batch, input length, input_size
    HID_TB = 8                    # stand-in for 512 temporal channels
    HID_FC = 32                   # stand-in for 512 intermediate features
    CLS = 16                      # gloss vocabulary size
    K = 5

    key = jax.random.PRNGKey(0)
    ks = jax.random.split(key, 16)
    x = jax.random.normal(ks[0], (B, Tin, D), jnp.float32)
    valid_len_in = jnp.array([16, 11], jnp.int32)

    params = {
        "temporal_blocks": [{
            "conv_w": jax.random.normal(ks[1], (HID_TB, D, K), jnp.float32) * 0.2,
            "conv_b": jax.random.normal(ks[2], (HID_TB,), jnp.float32) * 0.1,
            "bn_gamma": 1.0 + 0.1 * jax.random.normal(ks[3], (HID_TB,), jnp.float32),
            "bn_beta": 0.1 * jax.random.normal(ks[4], (HID_TB,), jnp.float32),
            "bn_mean": 0.1 * jax.random.normal(ks[5], (HID_TB,), jnp.float32),
            "bn_var": 1.0 + 0.1 * jax.random.uniform(ks[6], (HID_TB,), jnp.float32),
        }],
        "fc_w": jax.random.normal(ks[7], (HID_FC, HID_TB), jnp.float32) * 0.2,
        "fc_b": jax.random.normal(ks[8], (HID_FC,), jnp.float32) * 0.1,
        "fc_bn_gamma": 1.0 + 0.1 * jax.random.normal(ks[9], (HID_FC,), jnp.float32),
        "fc_bn_beta": 0.1 * jax.random.normal(ks[10], (HID_FC,), jnp.float32),
        "fc_bn_mean": 0.1 * jax.random.normal(ks[11], (HID_FC,), jnp.float32),
        "fc_bn_var": 1.0 + 0.1 * jax.random.uniform(ks[12], (HID_FC,), jnp.float32),
        "gloss_w": jax.random.normal(ks[13], (CLS, HID_FC), jnp.float32) * 0.2,
        "gloss_b": jax.random.normal(ks[14], (CLS,), jnp.float32) * 0.1,
    }

    Tout = Tin // 2 + 1
    ref = _reference_forward(x, valid_len_in, params)

    # f32 MXU path (tight tolerance vs. unfused reference)
    fwd_f32 = jax.jit(functools.partial(visual_head_new_forward,
                                        compute_dtype=jnp.float32))
    out = fwd_f32(x, valid_len_in, params)
    jax.block_until_ready(out)

    assert out["gloss_logits"].shape == (B, Tout, CLS)
    assert out["gloss_feature"].shape == (B, Tout, HID_FC)
    assert jnp.array_equal(out["valid_len_out"], ref["valid_len_out"])
    for name in ("gloss_feature", "gloss_logits",
                 "gloss_probabilities_log", "gloss_probabilities"):
        assert jnp.allclose(out[name], ref[name], atol=1e-4, rtol=1e-4), name

    # bf16 MXU path (halves activation/weight HBM bytes on v6e/v7x)
    fwd_bf16 = jax.jit(functools.partial(visual_head_new_forward,
                                         compute_dtype=jnp.bfloat16))
    out16 = fwd_bf16(x, valid_len_in, params)
    jax.block_until_ready(out16)
    assert out16["gloss_logits"].shape == (B, Tout, CLS)
    assert bool(jnp.all(jnp.isfinite(out16["gloss_probabilities"])))

    print("KERNEL_OK")
</pallas_src>

<mosaic_0001>
module attributes {stable_mosaic.version = 11 : i64} {
  func.func @_conv_bn_relu_kernel(%arg0: i32, %arg1: i32, %arg2: memref<1x1x20x4xf32, #tpu.memory_space<vmem>>, %arg3: memref<5x4x128xf32, #tpu.memory_space<vmem>>, %arg4: memref<1x128xf32, #tpu.memory_space<vmem>>, %arg5: memref<1x16x128xf32, #tpu.memory_space<vmem>>) attributes {dimension_semantics = [#tpu.dimension_semantics<parallel>, #tpu.dimension_semantics<parallel>], iteration_bounds = array<i64: 2, 1>, scalar_prefetch = 0 : i64, scratch_operands = 0 : i64, tpu.core_type = #tpu.core_type<tc>, window_params = [{transform_indices = @transform_0, window_bounds = array<i64: 1, 1, 20, 4>}, {pipeline_mode = #tpu.pipeline_mode<synchronous>, transform_indices = @transform_1, window_bounds = array<i64: 5, 4, 128>}, {pipeline_mode = #tpu.pipeline_mode<synchronous>, transform_indices = @transform_2, window_bounds = array<i64: 1, 128>}, {transform_indices = @transform_3, window_bounds = array<i64: 1, 16, 128>}]} {
    %c0 = arith.constant 0 : index
    %c0_0 = arith.constant 0 : index
    %c0_1 = arith.constant 0 : index
    %c0_2 = arith.constant 0 : index
    %0 = vector.load %arg2[%c0, %c0_0, %c0_1, %c0_2] : memref<1x1x20x4xf32, #tpu.memory_space<vmem>>, vector<1x1x16x4xf32>
    %1 = vector.shape_cast %0 : vector<1x1x16x4xf32> to vector<16x4xf32>
    %c0_3 = arith.constant 0 : index
    %c0_4 = arith.constant 0 : index
    %c0_5 = arith.constant 0 : index
    %2 = vector.load %arg3[%c0_3, %c0_4, %c0_5] : memref<5x4x128xf32, #tpu.memory_space<vmem>>, vector<1x4x128xf32>
    %3 = vector.shape_cast %2 : vector<1x4x128xf32> to vector<4x128xf32>
    %cst = arith.constant dense<0.000000e+00> : vector<16x128xf32>
    %4 = tpu.matmul %1, %3, %cst {dimension_numbers = #tpu.dot_dimension_numbers<[1], [0], [0], [1], [0, 0, 1, 1], [], []>} : vector<16x4xf32>, vector<4x128xf32>, vector<16x128xf32> -> vector<16x128xf32>
    %c0_6 = arith.constant 0 : index
    %c0_7 = arith.constant 0 : index
    %c1 = arith.constant 1 : index
    %c0_8 = arith.constant 0 : index
    %5 = vector.load %arg2[%c0_6, %c0_7, %c1, %c0_8] : memref<1x1x20x4xf32, #tpu.memory_space<vmem>>, vector<1x1x16x4xf32>
    %6 = vector.shape_cast %5 : vector<1x1x16x4xf32> to vector<16x4xf32>
    %c1_9 = arith.constant 1 : index
    %c0_10 = arith.constant 0 : index
    %c0_11 = arith.constant 0 : index
    %7 = vector.load %arg3[%c1_9, %c0_10, %c0_11] : memref<5x4x128xf32, #tpu.memory_space<vmem>>, vector<1x4x128xf32>
    %8 = vector.shape_cast %7 : vector<1x4x128xf32> to vector<4x128xf32>
    %cst_12 = arith.constant dense<0.000000e+00> : vector<16x128xf32>
    %9 = tpu.matmul %6, %8, %cst_12 {dimension_numbers = #tpu.dot_dimension_numbers<[1], [0], [0], [1], [0, 0, 1, 1], [], []>} : vector<16x4xf32>, vector<4x128xf32>, vector<16x128xf32> -> vector<16x128xf32>
    %10 = arith.addf %4, %9 : vector<16x128xf32>
    %c0_13 = arith.constant 0 : index
    %c0_14 = arith.constant 0 : index
    %c2 = arith.constant 2 : index
    %c0_15 = arith.constant 0 : index
    %11 = vector.load %arg2[%c0_13, %c0_14, %c2, %c0_15] : memref<1x1x20x4xf32, #tpu.memory_space<vmem>>, vector<1x1x16x4xf32>
    %12 = vector.shape_cast %11 : vector<1x1x16x4xf32> to vector<16x4xf32>
    %c2_16 = arith.constant 2 : index
    %c0_17 = arith.constant 0 : index
    %c0_18 = arith.constant 0 : index
    %13 = vector.load %arg3[%c2_16, %c0_17, %c0_18] : memref<5x4x128xf32, #tpu.memory_space<vmem>>, vector<1x4x128xf32>
    %14 = vector.shape_cast %13 : vector<1x4x128xf32> to vector<4x128xf32>
    %cst_19 = arith.constant dense<0.000000e+00> : vector<16x128xf32>
    %15 = tpu.matmul %12, %14, %cst_19 {dimension_numbers = #tpu.dot_dimension_numbers<[1], [0], [0], [1], [0, 0, 1, 1], [], []>} : vector<16x4xf32>, vector<4x128xf32>, vector<16x128xf32> -> vector<16x128xf32>
    %16 = arith.addf %10, %15 : vector<16x128xf32>
    %c0_20 = arith.constant 0 : index
    %c0_21 = arith.constant 0 : index
    %c3 = arith.constant 3 : index
    %c0_22 = arith.constant 0 : index
    %17 = vector.load %arg2[%c0_20, %c0_21, %c3, %c0_22] : memref<1x1x20x4xf32, #tpu.memory_space<vmem>>, vector<1x1x16x4xf32>
    %18 = vector.shape_cast %17 : vector<1x1x16x4xf32> to vector<16x4xf32>
    %c3_23 = arith.constant 3 : index
    %c0_24 = arith.constant 0 : index
    %c0_25 = arith.constant 0 : index
    %19 = vector.load %arg3[%c3_23, %c0_24, %c0_25] : memref<5x4x128xf32, #tpu.memory_space<vmem>>, vector<1x4x128xf32>
    %20 = vector.shape_cast %19 : vector<1x4x128xf32> to vector<4x128xf32>
    %cst_26 = arith.constant dense<0.000000e+00> : vector<16x128xf32>
    %21 = tpu.matmul %18, %20, %cst_26 {dimension_numbers = #tpu.dot_dimension_numbers<[1], [0], [0], [1], [0, 0, 1, 1], [], []>} : vector<16x4xf32>, vector<4x128xf32>, vector<16x128xf32> -> vector<16x128xf32>
    %22 = arith.addf %16, %21 : vector<16x128xf32>
    %c0_27 = arith.constant 0 : index
    %c0_28 = arith.constant 0 : index
    %c4 = arith.constant 4 : index
    %c0_29 = arith.constant 0 : index
    %23 = vector.load %arg2[%c0_27, %c0_28, %c4, %c0_29] : memref<1x1x20x4xf32, #tpu.memory_space<vmem>>, vector<1x1x16x4xf32>
    %24 = vector.shape_cast %23 : vector<1x1x16x4xf32> to vector<16x4xf32>
    %c4_30 = arith.constant 4 : index
    %c0_31 = arith.constant 0 : index
    %c0_32 = arith.constant 0 : index
    %25 = vector.load %arg3[%c4_30, %c0_31, %c0_32] : memref<5x4x128xf32, #tpu.memory_space<vmem>>, vector<1x4x128xf32>
    %26 = vector.shape_cast %25 : vector<1x4x128xf32> to vector<4x128xf32>
    %cst_33 = arith.constant dense<0.000000e+00> : vector<16x128xf32>
    %27 = tpu.matmul %24, %26, %cst_33 {dimension_numbers = #tpu.dot_dimension_numbers<[1], [0], [0], [1], [0, 0, 1, 1], [], []>} : vector<16x4xf32>, vector<4x128xf32>, vector<16x128xf32> -> vector<16x128xf32>
    %28 = arith.addf %22, %27 : vector<16x128xf32>
    %c0_34 = arith.constant 0 : index
    %c0_35 = arith.constant 0 : index
    %29 = vector.load %arg4[%c0_34, %c0_35] : memref<1x128xf32, #tpu.memory_space<vmem>>, vector<1x128xf32>
    %30 = vector.broadcast %29 : vector<1x128xf32> to vector<16x128xf32>
    %31 = arith.addf %28, %30 : vector<16x128xf32>
    %cst_36 = arith.constant 0.000000e+00 : f32
    %32 = vector.broadcast %cst_36 : f32 to vector<16x128xf32>
    %33 = arith.maximumf %31, %32 : vector<16x128xf32>
    %c0_37 = arith.constant 0 : index
    %c0_38 = arith.constant 0 : index
    %c0_39 = arith.constant 0 : index
    %34 = vector.load %arg5[%c0_37, %c0_38, %c0_39] : memref<1x16x128xf32, #tpu.memory_space<vmem>>, vector<1x16x128xf32>
    %35 = vector.shape_cast %34 : vector<1x16x128xf32> to vector<16x128xf32>
    %36 = vector.shape_cast %33 : vector<16x128xf32> to vector<1x16x128xf32>
    tpu.vector_store %arg5[%c0_37, %c0_38, %c0_39], %36 {strides = array<i32>} : memref<1x16x128xf32, #tpu.memory_space<vmem>>, vector<1x16x128xf32>,
    return
  }
  func.func @transform_0(%arg0: i32, %arg1: i32) -> (i32, i32, i32, i32) {
    %c0_i32 = arith.constant 0 : i32
    %c0_i32_0 = arith.constant 0 : i32
    %c0_i32_1 = arith.constant 0 : i32
    return %arg0, %arg1, %c0_i32, %c0_i32_0 : i32, i32, i32, i32
  }
  func.func @transform_1(%arg0: i32, %arg1: i32) -> (i32, i32, i32) {
    %c0_i32 = arith.constant 0 : i32
    %c0_i32_0 = arith.constant 0 : i32
    %c0_i32_1 = arith.constant 0 : i32
    %c0_i32_2 = arith.constant 0 : i32
    return %c0_i32, %c0_i32_0, %c0_i32_1 : i32, i32, i32
  }
  func.func @transform_2(%arg0: i32, %arg1: i32) -> (i32, i32) {
    %c0_i32 = arith.constant 0 : i32
    %c0_i32_0 = arith.constant 0 : i32
    %c0_i32_1 = arith.constant 0 : i32
    return %c0_i32, %c0_i32_0 : i32, i32
  }
  func.func @transform_3(%arg0: i32, %arg1: i32) -> (i32, i32, i32) {
    %c0_i32 = arith.constant 0 : i32
    %c0_i32_0 = arith.constant 0 : i32
    return %arg0, %arg1, %c0_i32 : i32, i32, i32
  }
}

module attributes {stable_mosaic.version = 11 : i64} {
  func.func @_maxpool2_kernel(%arg0: i32, %arg1: i32, %arg2: memref<1x16x8xf32, #tpu.memory_space<vmem>>, %arg3: memref<1x16x8xf32, #tpu.memory_space<vmem>>, %arg4: memref<1x16x8xf32, #tpu.memory_space<vmem>>) attributes {dimension_semantics = [#tpu.dimension_semantics<parallel>, #tpu.dimension_semantics<parallel>], iteration_bounds = array<i64: 2, 1>, scalar_prefetch = 0 : i64, scratch_operands = 0 : i64, tpu.core_type = #tpu.core_type<tc>, window_params = [{transform_indices = @transform_0, window_bounds = array<i64: 1, 16, 8>}, {transform_indices = @transform_1, window_bounds = array<i64: 1, 16, 8>}, {transform_indices = @transform_2, window_bounds = array<i64: 1, 16, 8>}]} {
    %c0 = arith.constant 0 : index
    %c0_0 = arith.constant 0 : index
    %c0_1 = arith.constant 0 : index
    %0 = vector.load %arg2[%c0, %c0_0, %c0_1] : memref<1x16x8xf32, #tpu.memory_space<vmem>>, vector<1x16x8xf32>
    %c0_2 = arith.constant 0 : index
    %c0_3 = arith.constant 0 : index
    %c0_4 = arith.constant 0 : index
    %1 = vector.load %arg3[%c0_2, %c0_3, %c0_4] : memref<1x16x8xf32, #tpu.memory_space<vmem>>, vector<1x16x8xf32>
    %2 = arith.maximumf %0, %1 : vector<1x16x8xf32>
    %c0_5 = arith.constant 0 : index
    %c0_6 = arith.constant 0 : index
    %c0_7 = arith.constant 0 : index
    %3 = vector.load %arg4[%c0_5, %c0_6, %c0_7] : memref<1x16x8xf32, #tpu.memory_space<vmem>>, vector<1x16x8xf32>
    tpu.vector_store %arg4[%c0_5, %c0_6, %c0_7], %2 {strides = array<i32>} : memref<1x16x8xf32, #tpu.memory_space<vmem>>, vector<1x16x8xf32>,
    return
  }
  func.func @transform_0(%arg0: i32, %arg1: i32) -> (i32, i32, i32) {
    %c0_i32 = arith.constant 0 : i32
    %c0_i32_0 = arith.constant 0 : i32
    return %arg0, %arg1, %c0_i32 : i32, i32, i32
  }
  func.func @transform_1(%arg0: i32, %arg1: i32) -> (i32, i32, i32) {
    %c0_i32 = arith.constant 0 : i32
    %c0_i32_0 = arith.constant 0 : i32
    return %arg0, %arg1, %c0_i32 : i32, i32, i32
  }
  func.func @transform_2(%arg0: i32, %arg1: i32) -> (i32, i32, i32) {
    %c0_i32 = arith.constant 0 : i32
    %c0_i32_0 = arith.constant 0 : i32
    return %arg0, %arg1, %c0_i32 : i32, i32, i32
  }
}

module attributes {stable_mosaic.version = 11 : i64} {
  func.func @_linear_bn_relu_kernel(%arg0: i32, %arg1: memref<24x8xf32, #tpu.memory_space<vmem>>, %arg2: memref<8x128xf32, #tpu.memory_space<vmem>>, %arg3: memref<1x128xf32, #tpu.memory_space<vmem>>, %arg4: memref<24x128xf32, #tpu.memory_space<vmem>>) attributes {dimension_semantics = [#tpu.dimension_semantics<parallel>], iteration_bounds = array<i64: 1>, scalar_prefetch = 0 : i64, scratch_operands = 0 : i64, tpu.core_type = #tpu.core_type<tc>, window_params = [{transform_indices = @transform_0, window_bounds = array<i64: 24, 8>}, {pipeline_mode = #tpu.pipeline_mode<synchronous>, transform_indices = @transform_1, window_bounds = array<i64: 8, 128>}, {pipeline_mode = #tpu.pipeline_mode<synchronous>, transform_indices = @transform_2, window_bounds = array<i64: 1, 128>}, {transform_indices = @transform_3, window_bounds = array<i64: 24, 128>}]} {
    %c0 = arith.constant 0 : index
    %c0_0 = arith.constant 0 : index
    %0 = vector.load %arg1[%c0, %c0_0] : memref<24x8xf32, #tpu.memory_space<vmem>>, vector<24x8xf32>
    %c0_1 = arith.constant 0 : index
    %c0_2 = arith.constant 0 : index
    %1 = vector.load %arg2[%c0_1, %c0_2] : memref<8x128xf32, #tpu.memory_space<vmem>>, vector<8x128xf32>
    %cst = arith.constant dense<0.000000e+00> : vector<24x128xf32>
    %2 = tpu.matmul %0, %1, %cst {dimension_numbers = #tpu.dot_dimension_numbers<[1], [0], [0], [1], [0, 0, 1, 1], [], []>} : vector<24x8xf32>, vector<8x128xf32>, vector<24x128xf32> -> vector<24x128xf32>
    %c0_3 = arith.constant 0 : index
    %c0_4 = arith.constant 0 : index
    %3 = vector.load %arg3[%c0_3, %c0_4] : memref<1x128xf32, #tpu.memory_space<vmem>>, vector<1x128xf32>
    %4 = vector.broadcast %3 : vector<1x128xf32> to vector<24x128xf32>
    %5 = arith.addf %2, %4 : vector<24x128xf32>
    %cst_5 = arith.constant 0.000000e+00 : f32
    %6 = vector.broadcast %cst_5 : f32 to vector<24x128xf32>
    %7 = arith.maximumf %5, %6 : vector<24x128xf32>
    %c0_6 = arith.constant 0 : index
    %c0_7 = arith.constant 0 : index
    %8 = vector.load %arg4[%c0_6, %c0_7] : memref<24x128xf32, #tpu.memory_space<vmem>>, vector<24x128xf32>
    tpu.vector_store %arg4[%c0_6, %c0_7], %7 {strides = array<i32>} : memref<24x128xf32, #tpu.memory_space<vmem>>, vector<24x128xf32>,
    return
  }
  func.func @transform_0(%arg0: i32) -> (i32, i32) {
    %c0_i32 = arith.constant 0 : i32
    %c0_i32_0 = arith.constant 0 : i32
    return %arg0, %c0_i32 : i32, i32
  }
  func.func @transform_1(%arg0: i32) -> (i32, i32) {
    %c0_i32 = arith.constant 0 : i32
    %c0_i32_0 = arith.constant 0 : i32
    %c0_i32_1 = arith.constant 0 : i32
    return %c0_i32, %c0_i32_0 : i32, i32
  }
  func.func @transform_2(%arg0: i32) -> (i32, i32) {
    %c0_i32 = arith.constant 0 : i32
    %c0_i32_0 = arith.constant 0 : i32
    %c0_i32_1 = arith.constant 0 : i32
    return %c0_i32, %c0_i32_0 : i32, i32
  }
  func.func @transform_3(%arg0: i32) -> (i32, i32) {
    %c0_i32 = arith.constant 0 : i32
    %c0_i32_0 = arith.constant 0 : i32
    return %arg0, %c0_i32 : i32, i32
  }
}

module attributes {stable_mosaic.version = 11 : i64} {
  func.func @_gloss_head_kernel(%arg0: i32, %arg1: memref<24x32xf32, #tpu.memory_space<vmem>>, %arg2: memref<32x128xf32, #tpu.memory_space<vmem>>, %arg3: memref<1x128xf32, #tpu.memory_space<vmem>>, %arg4: memref<24x128xf32, #tpu.memory_space<vmem>>, %arg5: memref<24x128xf32, #tpu.memory_space<vmem>>, %arg6: memref<24x128xf32, #tpu.memory_space<vmem>>) attributes {dimension_semantics = [#tpu.dimension_semantics<parallel>], iteration_bounds = array<i64: 1>, scalar_prefetch = 0 : i64, scratch_operands = 0 : i64, tpu.core_type = #tpu.core_type<tc>, window_params = [{transform_indices = @transform_0, window_bounds = array<i64: 24, 32>}, {pipeline_mode = #tpu.pipeline_mode<synchronous>, transform_indices = @transform_1, window_bounds = array<i64: 32, 128>}, {pipeline_mode = #tpu.pipeline_mode<synchronous>, transform_indices = @transform_2, window_bounds = array<i64: 1, 128>}, {transform_indices = @transform_3, window_bounds = array<i64: 24, 128>}, {transform_indices = @transform_4, window_bounds = array<i64: 24, 128>}, {transform_indices = @transform_5, window_bounds = array<i64: 24, 128>}]} {
    %c0 = arith.constant 0 : index
    %c0_0 = arith.constant 0 : index
    %0 = vector.load %arg1[%c0, %c0_0] : memref<24x32xf32, #tpu.memory_space<vmem>>, vector<24x32xf32>
    %c0_1 = arith.constant 0 : index
    %c0_2 = arith.constant 0 : index
    %1 = vector.load %arg2[%c0_1, %c0_2] : memref<32x128xf32, #tpu.memory_space<vmem>>, vector<32x128xf32>
    %cst = arith.constant dense<0.000000e+00> : vector<24x128xf32>
    %2 = tpu.matmul %0, %1, %cst {dimension_numbers = #tpu.dot_dimension_numbers<[1], [0], [0], [1], [0, 0, 1, 1], [], []>} : vector<24x32xf32>, vector<32x128xf32>, vector<24x128xf32> -> vector<24x128xf32>
    %c0_3 = arith.constant 0 : index
    %c0_4 = arith.constant 0 : index
    %3 = vector.load %arg3[%c0_3, %c0_4] : memref<1x128xf32, #tpu.memory_space<vmem>>, vector<1x128xf32>
    %4 = vector.broadcast %3 : vector<1x128xf32> to vector<24x128xf32>
    %5 = arith.addf %2, %4 : vector<24x128xf32>
    %6 = tpu.iota {dimensions = array<i32: 1>} : vector<24x128xi32>
    %c16_i32 = arith.constant 16 : i32
    %7 = vector.broadcast %c16_i32 : i32 to vector<24x128xi32>
    %8 = arith.cmpi slt, %6, %7 : vector<24x128xi32>
    %cst_5 = arith.constant -1.000000e+30 : f32
    %9 = vector.broadcast %cst_5 : f32 to vector<24x128xf32>
    %10 = arith.select %8, %5, %9 : vector<24x128xi1>, vector<24x128xf32>
    %cst_6 = arith.constant dense<0xFF800000> : vector<24xf32>
    %11 = vector.multi_reduction <maximumf>, %10, %cst_6 [1] : vector<24x128xf32> to vector<24xf32>
    %12 = vector.shape_cast %11 : vector<24xf32> to vector<24x1xf32>
    %13 = vector.broadcast %12 : vector<24x1xf32> to vector<24x128xf32>
    %14 = arith.subf %10, %13 : vector<24x128xf32>
    %15 = math.exp %14 : vector<24x128xf32>
    %cst_7 = arith.constant dense<0.000000e+00> : vector<24xf32>
    %16 = vector.multi_reduction <add>, %15, %cst_7 [1] : vector<24x128xf32> to vector<24xf32>
    %17 = vector.shape_cast %16 : vector<24xf32> to vector<24x1xf32>
    %18 = vector.broadcast %12 : vector<24x1xf32> to vector<24x128xf32>
    %19 = arith.subf %10, %18 : vector<24x128xf32>
    %20 = math.log %17 : vector<24x1xf32>
    %21 = vector.broadcast %20 : vector<24x1xf32> to vector<24x128xf32>
    %22 = arith.subf %19, %21 : vector<24x128xf32>
    %23 = vector.broadcast %17 : vector<24x1xf32> to vector<24x128xf32>
    %24 = arith.divf %15, %23 : vector<24x128xf32>
    %c0_8 = arith.constant 0 : index
    %c0_9 = arith.constant 0 : index
    %25 = vector.load %arg4[%c0_8, %c0_9] : memref<24x128xf32, #tpu.memory_space<vmem>>, vector<24x128xf32>
    tpu.vector_store %arg4[%c0_8, %c0_9], %5 {strides = array<i32>} : memref<24x128xf32, #tpu.memory_space<vmem>>, vector<24x128xf32>,
    %c0_10 = arith.constant 0 : index
    %c0_11 = arith.constant 0 : index
    %26 = vector.load %arg5[%c0_10, %c0_11] : memref<24x128xf32, #tpu.memory_space<vmem>>, vector<24x128xf32>
    tpu.vector_store %arg5[%c0_10, %c0_11], %22 {strides = array<i32>} : memref<24x128xf32, #tpu.memory_space<vmem>>, vector<24x128xf32>,
    %c0_12 = arith.constant 0 : index
    %c0_13 = arith.constant 0 : index
    %27 = vector.load %arg6[%c0_12, %c0_13] : memref<24x128xf32, #tpu.memory_space<vmem>>, vector<24x128xf32>
    tpu.vector_store %arg6[%c0_12, %c0_13], %24 {strides = array<i32>} : memref<24x128xf32, #tpu.memory_space<vmem>>, vector<24x128xf32>,
    return
  }
  func.func @transform_0(%arg0: i32) -> (i32, i32) {
    %c0_i32 = arith.constant 0 : i32
    %c0_i32_0 = arith.constant 0 : i32
    return %arg0, %c0_i32 : i32, i32
  }
  func.func @transform_1(%arg0: i32) -> (i32, i32) {
    %c0_i32 = arith.constant 0 : i32
    %c0_i32_0 = arith.constant 0 : i32
    %c0_i32_1 = arith.constant 0 : i32
    return %c0_i32, %c0_i32_0 : i32, i32
  }
  func.func @transform_2(%arg0: i32) -> (i32, i32) {
    %c0_i32 = arith.constant 0 : i32
    %c0_i32_0 = arith.constant 0 : i32
    %c0_i32_1 = arith.constant 0 : i32
    return %c0_i32, %c0_i32_0 : i32, i32
  }
  func.func @transform_3(%arg0: i32) -> (i32, i32) {
    %c0_i32 = arith.constant 0 : i32
    %c0_i32_0 = arith.constant 0 : i32
    return %arg0, %c0_i32 : i32, i32
  }
  func.func @transform_4(%arg0: i32) -> (i32, i32) {
    %c0_i32 = arith.constant 0 : i32
    %c0_i32_0 = arith.constant 0 : i32
    return %arg0, %c0_i32 : i32, i32
  }
  func.func @transform_5(%arg0: i32) -> (i32, i32) {
    %c0_i32 = arith.constant 0 : i32
    %c0_i32_0 = arith.constant 0 : i32
    return %arg0, %c0_i32 : i32, i32
  }
}

</mosaic_0001>

<llo_original>
// kernel: visual_head_new_forward.5
$region0: #{visual_head_new_forward.5}
  #allocation0 [shape = 'u32[]', space=smem, size = 0x4, offset = 0x4, fixed_abs, tag = 'smem constant byte address 0x4 - core index']
  #allocation1 [shape = 'u32[144,128]{1,0:T(1,128)}', space=vmem, size = 0x12000, scoped, tag = 'internal scratch']
  %s0 = inlined_call_operand.vmem [shape: f32[2,16,8], index: 0, kind: input, shape index: {}]
  %s1 = inlined_call_operand.vmem [shape: f32[2,16,8], index: 1, kind: input, shape index: {}]
  %s2 = inlined_call_operand.vmem [shape: f32[2,16,8], index: 2, kind: output, shape index: {}]
  %s3 = sld [smem:[#allocation0]]
  $region41: #{visual_head_new_forward.5} parent=0
    _
  %s5 = ssub.s32 1, %s3
  %s6 = scalar_select 0, %s5, %s3
  loop: start=0, step=1, limit=4
  $region2: #{visual_head_new_forward.5} parent=0 // loop_pre_header
    _
  $region3: #{visual_head_new_forward.5} parent=0 // loop_header
    %s8 = sphi 0, %s12
    %p9 = scmp.ge.s32.totalorder %s8, 4
    %s15 = sphi 0, %s27
    %s16 = sphi 0, %s23
    %s17 = sphi 0, %s15
    %s18 = sphi 0, %s16
    %s19 = sphi 0, %s17
    %s20 = sphi 0, %s18
    %s32 = sphi 0, %s34
    %s35 = sphi 0, %s32
    %s36 = sphi 0, %s35
    %s52 = sphi 0, %s36
    %s60 = sphi 0, %s62
    %s63 = sphi 0, %s60
    %s64 = sphi 0, %s63
    %s80 = sphi 0, %s64
    %s88 = sphi 0, %s90
    %s91 = sphi 0, %s88
    %s92 = sphi 0, %s91
    %s108 = sphi 0, %s92
  $region4: #{visual_head_new_forward.5} parent=0 // loop_header_branch
    %11 = sbr.rel (%p9) target = $region8
  $region5: #{visual_head_new_forward.5} parent=0 // loop_body
    %s13 = ssub.s32 %s8, 1
    %s14 = ssub.s32 %s8, 2
    %s21 = sadd.s32 1, %s16
    %p22 = scmp.ge.s32.totalorder %s21, 1
    %s23 = scalar_select %p22, 0, %s21
    %s24 = sadd.s32 1, %s15
    %s25 = scalar_select %p22, %s24, %s15
    %p26 = scmp.ge.s32.totalorder %s25, 2
    %s27 = scalar_select %p26, 0, %s25
    %s28 = ssub.s32 %s15, %s27
    %s29 = ssub.s32 %s16, %s23
    %s30 = sor.u32 %s28, %s29
    %p31 = scmp.eq.s32.totalorder %s30, 0
    %s33 = sadd.s32 %s32, 1
    %s34 = scalar_select %p31, %s32, %s33
    %p37 = pneg %p31
    %p38 = scmp.eq.s32.totalorder %s8, 1
    %p39 = por %p37, %p38
    %p40 = scmp.ne.s32.totalorder %s32, %s35
    %p41 = scmp.eq.s32.totalorder %s8, 0
    %p42 = por %p40, %p41
    %p43 = scmp.ne.s32.totalorder %s32, %s35
    %p44 = scmp.eq.s32.totalorder %s13, 1
    %p45 = por %p43, %p44
    %p46 = scmp.ne.s32.totalorder %s35, %s36
    %p47 = scmp.eq.s32.totalorder %s13, 0
    %p48 = por %p46, %p47
    %p49 = scmp.ne.s32.totalorder %s35, %s36
    %p50 = scmp.eq.s32.totalorder %s14, 1
    %p51 = por %p49, %p50
    %p53 = scmp.ne.s32.totalorder %s36, %s52
    %p54 = scmp.eq.s32.totalorder %s14, 0
    %p55 = por %p53, %p54
    %s56 = ssub.s32 %s15, %s27
    %s57 = ssub.s32 %s16, %s23
    %s58 = sor.u32 %s56, %s57
    %p59 = scmp.eq.s32.totalorder %s58, 0
    %s61 = sadd.s32 %s60, 1
    %s62 = scalar_select %p59, %s60, %s61
    %p65 = pneg %p59
    %p66 = scmp.eq.s32.totalorder %s8, 1
    %p67 = por %p65, %p66
    %p68 = scmp.ne.s32.totalorder %s60, %s63
    %p69 = scmp.eq.s32.totalorder %s8, 0
    %p70 = por %p68, %p69
    %p71 = scmp.ne.s32.totalorder %s60, %s63
    %p72 = scmp.eq.s32.totalorder %s13, 1
    %p73 = por %p71, %p72
    %p74 = scmp.ne.s32.totalorder %s63, %s64
    %p75 = scmp.eq.s32.totalorder %s13, 0
    %p76 = por %p74, %p75
    %p77 = scmp.ne.s32.totalorder %s63, %s64
    %p78 = scmp.eq.s32.totalorder %s14, 1
    %p79 = por %p77, %p78
    %p81 = scmp.ne.s32.totalorder %s64, %s80
    %p82 = scmp.eq.s32.totalorder %s14, 0
    %p83 = por %p81, %p82
    %s84 = ssub.s32 %s15, %s27
    %s85 = ssub.s32 %s16, %s23
    %s86 = sor.u32 %s84, %s85
    %p87 = scmp.eq.s32.totalorder %s86, 0
    %s89 = sadd.s32 %s88, 1
    %s90 = scalar_select %p87, %s88, %s89
    %p93 = pneg %p87
    %p94 = scmp.eq.s32.totalorder %s8, 1
    %p95 = por %p93, %p94
    %p96 = scmp.ne.s32.totalorder %s88, %s91
    %p97 = scmp.eq.s32.totalorder %s8, 0
    %p98 = por %p96, %p97
    %p99 = scmp.ne.s32.totalorder %s88, %s91
    %p100 = scmp.eq.s32.totalorder %s13, 1
    %p101 = por %p99, %p100
    %p102 = scmp.ne.s32.totalorder %s91, %s92
    %p103 = scmp.eq.s32.totalorder %s13, 0
    %p104 = por %p102, %p103
    %p105 = scmp.ne.s32.totalorder %s91, %s92
    %p106 = scmp.eq.s32.totalorder %s14, 1
    %p107 = por %p105, %p106
    %p109 = scmp.ne.s32.totalorder %s92, %s108
    %p110 = scmp.eq.s32.totalorder %s14, 0
    %p111 = por %p109, %p110
    %p112 = scmp.le.s32.totalorder 1, %s8
    %p113 = scmp.lt.s32.totalorder %s8, 3
    %p114 = pnand %p112, %p113
    %p115 = pneg %p114
    // Predicated region
    $region9: #{visual_head_new_forward.5} parent=5 // pred_check
      _
    $region10: #{visual_head_new_forward.5} parent=5 // pred_check_branch
      %117 = sbr.rel (%p114) target = $region12
    $region11: #{visual_head_new_forward.5} parent=5 // pred_region
      %s118 = ssub.s32 %s8, 1
    $region12: #{visual_head_new_forward.5} parent=5 // pred_fallthru
      _
    %p119 = scmp.lt.s32.totalorder %s8, 2
    // Predicated region
    $region13: #{visual_head_new_forward.5} parent=5 // pred_check
      %p120 = pneg %p119
    $region14: #{visual_head_new_forward.5} parent=5 // pred_check_branch
      %122 = sbr.rel (%p120) target = $region16
    $region15: #{visual_head_new_forward.5} parent=5 // pred_region
      // Predicated region
      $region17: #{visual_head_new_forward.5} parent=15 // pred_check
        %p123 = pneg %p42
      $region18: #{visual_head_new_forward.5} parent=15 // pred_check_branch
        %125 = sbr.rel (%p123) target = $region20
      $region19: #{visual_head_new_forward.5} parent=15 // pred_region
        %s126 = smul.u32 2, %s16
        %p127 = scmp.lt.s32.totalorder %s15, 1
        %s128 = scalar_select %p127, %s15, 1
        %p129 = scmp.lt.s32.totalorder %s126, 1
        %s130 = scalar_select %p129, %s126, 1
        %s131 = smul.addr %s128, 2
        %s132 = sadd.s32 %s130, %s131
        %s133 = smul.addr %s132, 8
        %s134 = scalar_lea.vmem %s0, %s133
        %s135 = smul.u32 2, %s16
      $region20: #{visual_head_new_forward.5} parent=15 // pred_fallthru
        _
      // Predicated region
      $region21: #{visual_head_new_forward.5} parent=15 // pred_check
        %p136 = pneg %p70
      $region22: #{visual_head_new_forward.5} parent=15 // pred_check_branch
        %138 = sbr.rel (%p136) target = $region24
      $region23: #{visual_head_new_forward.5} parent=15 // pred_region
        %s139 = smul.u32 2, %s16
        %p140 = scmp.lt.s32.totalorder %s15, 1
        %s141 = scalar_select %p140, %s15, 1
        %p142 = scmp.lt.s32.totalorder %s139, 1
        %s143 = scalar_select %p142, %s139, 1
        %s144 = smul.addr %s141, 2
        %s145 = sadd.s32 %s143, %s144
        %s146 = smul.addr %s145, 8
        %s147 = scalar_lea.vmem %s1, %s146
        %s148 = smul.u32 2, %s16
      $region24: #{visual_head_new_forward.5} parent=15 // pred_fallthru
        _
    $region16: #{visual_head_new_forward.5} parent=5 // pred_fallthru
      _
    %p149 = scmp.le.s32.totalorder 1, %s8
    %p150 = scmp.lt.s32.totalorder %s8, 3
    %p151 = pnand %p149, %p150
    %p152 = pneg %p151
    // Predicated region
    $region25: #{visual_head_new_forward.5} parent=5 // pred_check
      _
    $region26: #{visual_head_new_forward.5} parent=5 // pred_check_branch
      %154 = sbr.rel (%p151) target = $region28
    $region27: #{visual_head_new_forward.5} parent=5 // pred_region
      %s155 = ssub.s32 %s8, 1
      %s156 = smul.u32 2, %s18
      %p157 = scmp.lt.s32.totalorder %s17, 1
      %s158 = scalar_select %p157, %s17, 1
      %p159 = scmp.lt.s32.totalorder %s156, 1
      %s160 = scalar_select %p159, %s156, 1
      %s161 = smul.addr %s158, 2
      %s162 = sadd.s32 %s160, %s161
      %s163 = smul.addr %s162, 8
      %s164 = scalar_lea.vmem %s0, %s163
      %p165 = pneg %p48
      %p166 = pneg %p45
      %s167 = smul.u32 2, %s18
      %p168 = scmp.lt.s32.totalorder %s17, 1
      %s169 = scalar_select %p168, %s17, 1
      %p170 = scmp.lt.s32.totalorder %s167, 1
      %s171 = scalar_select %p170, %s167, 1
      %s172 = smul.addr %s169, 2
      %s173 = sadd.s32 %s171, %s172
      %s174 = smul.addr %s173, 8
      %s175 = scalar_lea.vmem %s1, %s174
      %p176 = pneg %p76
      %p177 = pneg %p73
      %p178 = pneg %p104
      %p179 = pneg %p101
      %s180 = smul.u32 2, %s18
      %p181 = scmp.lt.s32.totalorder %s17, 1
      %s182 = scalar_select %p181, %s17, 1
      %p183 = scmp.lt.s32.totalorder %s180, 1
      %s184 = scalar_select %p183, %s180, 1
      %s185 = smul.addr %s182, 2
      %s186 = sadd.s32 %s184, %s185
      %s187 = smul.addr %s186, 8
      %s188 = scalar_lea.vmem %s2, %s187
      %s189 = smul.u32 2, %s18
      %p190 = scmp.lt.s32.totalorder %s17, 1
      %s191 = scalar_select %p190, %s17, 1
      %p192 = scmp.lt.s32.totalorder %s189, 1
      %s193 = scalar_select %p192, %s189, 1
      %s194 = smul.addr %s191, 2
      %s195 = sadd.s32 %s193, %s194
      %s196 = smul.addr %s195, 8
      %s197 = scalar_lea.vmem %s0, %s196
      %s198 = smul.u32 2, %s18
      %s199 = smul.u32 2, %s18
      %p200 = scmp.lt.s32.totalorder %s17, 1
      %s201 = scalar_select %p200, %s17, 1
      %p202 = scmp.lt.s32.totalorder %s199, 1
      %s203 = scalar_select %p202, %s199, 1
      %s204 = smul.addr %s201, 2
      %s205 = sadd.s32 %s203, %s204
      %s206 = smul.addr %s205, 8
      %s207 = scalar_lea.vmem %s1, %s206
      %s208 = smul.u32 2, %s18
      %s209 = smul.u32 2, %s18
      %p210 = scmp.lt.s32.totalorder %s17, 1
      %s211 = scalar_select %p210, %s17, 1
      %p212 = scmp.lt.s32.totalorder %s209, 1
      %s213 = scalar_select %p212, %s209, 1
      %s214 = smul.addr %s211, 2
      %s215 = sadd.s32 %s213, %s214
      %s216 = smul.addr %s215, 8
      %s217 = scalar_lea.vmem %s2, %s216
      %s218 = smul.u32 2, %s18
      %v219 = vld [vmem:[%s197] sm:$0xff]
      %v220 = vld [vmem:[%s197 + $0x8] sm:$0xff]
      %v221 = vld [vmem:[%s207] sm:$0xff]
      %v222 = vld [vmem:[%s207 + $0x8] sm:$0xff]
      %v223 = vmax.f32 %v219, %v221
      %v224 = vmax.f32 %v220, %v222
      %vm225 = vcmask 64512
      %226 = vst.msk [vmem:[%s217] sm:$0xff] %vm225, %v223
      %227 = vst.msk [vmem:[%s217 + $0x8] sm:$0xff] %vm225, %v224
      %s228 = smul.u32 2, %s18
      %p229 = scmp.lt.s32.totalorder %s17, 1
      %s230 = scalar_select %p229, %s17, 1
      %p231 = scmp.lt.s32.totalorder %s228, 1
      %s232 = scalar_select %p231, %s228, 1
      %s233 = smul.addr %s230, 2
      %s234 = sadd.s32 %s232, %s233
      %s235 = smul.addr %s234, 8
      %s236 = scalar_lea.vmem %s2, %s235
      // Predicated region
      $region29: #{visual_head_new_forward.5} parent=27 // pred_check
        %p237 = pneg %p101
      $region30: #{visual_head_new_forward.5} parent=27 // pred_check_branch
        %239 = sbr.rel (%p237) target = $region32
      $region31: #{visual_head_new_forward.5} parent=27 // pred_region
        %s240 = smul.u32 2, %s18
      $region32: #{visual_head_new_forward.5} parent=27 // pred_fallthru
        _
    $region28: #{visual_head_new_forward.5} parent=5 // pred_fallthru
      _
    %p241 = scmp.le.s32.totalorder 2, %s8
    // Predicated region
    $region33: #{visual_head_new_forward.5} parent=5 // pred_check
      %p242 = pneg %p241
    $region34: #{visual_head_new_forward.5} parent=5 // pred_check_branch
      %244 = sbr.rel (%p242) target = $region36
    $region35: #{visual_head_new_forward.5} parent=5 // pred_region
      %s245 = ssub.s32 %s8, 2
      // Predicated region
      $region37: #{visual_head_new_forward.5} parent=35 // pred_check
        %p246 = pneg %p107
      $region38: #{visual_head_new_forward.5} parent=35 // pred_check_branch
        %248 = sbr.rel (%p246) target = $region40
      $region39: #{visual_head_new_forward.5} parent=35 // pred_region
        %s249 = smul.u32 2, %s20
        %p250 = scmp.lt.s32.totalorder %s19, 1
        %s251 = scalar_select %p250, %s19, 1
        %p252 = scmp.lt.s32.totalorder %s249, 1
        %s253 = scalar_select %p252, %s249, 1
        %s254 = smul.addr %s251, 2
        %s255 = sadd.s32 %s253, %s254
        %s256 = smul.addr %s255, 8
        %s257 = scalar_lea.vmem %s2, %s256
      $region40: #{visual_head_new_forward.5} parent=35 // pred_fallthru
        _
    $region36: #{visual_head_new_forward.5} parent=5 // pred_fallthru
      _
  $region6: #{visual_head_new_forward.5} parent=0 // loop_footer
    %s12 = sadd.s32 1, %s8
  $region7: #{visual_head_new_forward.5} parent=0 // loop_footer_branch
    %7 = sbr.rel target = $region3
  $region8: #{visual_head_new_forward.5} parent=0 // loop_exit
    _

// kernel: visual_head_new_forward.4
$region0: #{visual_head_new_forward.4}
  #allocation0 [shape = 'u32[]', space=smem, size = 0x4, offset = 0x4, fixed_abs, tag = 'smem constant byte address 0x4 - core index']
  #allocation1 [shape = 'u32[144,128]{1,0:T(1,128)}', space=vmem, size = 0x12000, scoped, tag = 'internal scratch']
  %s0 = inlined_call_operand.vmem [shape: f32[2,1,20,4], index: 0, kind: input, shape index: {}]
  %s1 = inlined_call_operand.vmem [shape: f32[5,4,128], index: 1, kind: input, shape index: {}]
  %s2 = inlined_call_operand.vmem [shape: f32[1,128], index: 2, kind: input, shape index: {}]
  %s3 = inlined_call_operand.vmem [shape: f32[2,16,128], index: 3, kind: output, shape index: {}]
  %s4 = sld [smem:[#allocation0]]
  $region45: #{visual_head_new_forward.4} parent=0
    _
  %s6 = ssub.s32 1, %s4
  %s7 = scalar_select 0, %s6, %s4
  loop: start=0, step=1, limit=4
  $region2: #{visual_head_new_forward.4} parent=0 // loop_pre_header
    _
  $region3: #{visual_head_new_forward.4} parent=0 // loop_header
    %s9 = sphi 0, %s13
    %p10 = scmp.ge.s32.totalorder %s9, 4
    %s16 = sphi 0, %s28
    %s17 = sphi 0, %s24
    %s18 = sphi 0, %s16
    %s19 = sphi 0, %s17
    %s20 = sphi 0, %s18
    %s21 = sphi 0, %s19
    %s33 = sphi 0, %s35
    %s36 = sphi 0, %s33
    %s37 = sphi 0, %s36
    %s53 = sphi 0, %s37
    %s57 = sphi 0, %s57
    %s59 = sphi 0, %s57
    %s60 = sphi 0, %s59
    %s74 = sphi 0, %s60
    %s78 = sphi 0, %s78
    %s80 = sphi 0, %s78
    %s81 = sphi 0, %s80
    %s95 = sphi 0, %s81
    %s103 = sphi 0, %s105
    %s106 = sphi 0, %s103
    %s107 = sphi 0, %s106
    %s123 = sphi 0, %s107
  $region4: #{visual_head_new_forward.4} parent=0 // loop_header_branch
    %12 = sbr.rel (%p10) target = $region8
  $region5: #{visual_head_new_forward.4} parent=0 // loop_body
    %s14 = ssub.s32 %s9, 1
    %s15 = ssub.s32 %s9, 2
    %s22 = sadd.s32 1, %s17
    %p23 = scmp.ge.s32.totalorder %s22, 1
    %s24 = scalar_select %p23, 0, %s22
    %s25 = sadd.s32 1, %s16
    %s26 = scalar_select %p23, %s25, %s16
    %p27 = scmp.ge.s32.totalorder %s26, 2
    %s28 = scalar_select %p27, 0, %s26
    %s29 = ssub.s32 %s16, %s28
    %s30 = ssub.s32 %s17, %s24
    %s31 = sor.u32 %s29, %s30
    %p32 = scmp.eq.s32.totalorder %s31, 0
    %s34 = sadd.s32 %s33, 1
    %s35 = scalar_select %p32, %s33, %s34
    %p38 = pneg %p32
    %p39 = scmp.eq.s32.totalorder %s9, 1
    %p40 = por %p38, %p39
    %p41 = scmp.ne.s32.totalorder %s33, %s36
    %p42 = scmp.eq.s32.totalorder %s9, 0
    %p43 = por %p41, %p42
    %p44 = scmp.ne.s32.totalorder %s33, %s36
    %p45 = scmp.eq.s32.totalorder %s14, 1
    %p46 = por %p44, %p45
    %p47 = scmp.ne.s32.totalorder %s36, %s37
    %p48 = scmp.eq.s32.totalorder %s14, 0
    %p49 = por %p47, %p48
    %p50 = scmp.ne.s32.totalorder %s36, %s37
    %p51 = scmp.eq.s32.totalorder %s15, 1
    %p52 = por %p50, %p51
    %p54 = scmp.ne.s32.totalorder %s37, %s53
    %p55 = scmp.eq.s32.totalorder %s15, 0
    %p56 = por %p54, %p55
    %s58 = sadd.s32 %s57, 1
    %p61 = scmp.eq.s32.totalorder %s9, 1
    %p62 = scmp.ne.s32.totalorder %s57, %s59
    %p63 = scmp.eq.s32.totalorder %s9, 0
    %p64 = por %p62, %p63
    %p65 = scmp.ne.s32.totalorder %s57, %s59
    %p66 = scmp.eq.s32.totalorder %s14, 1
    %p67 = por %p65, %p66
    %p68 = scmp.ne.s32.totalorder %s59, %s60
    %p69 = scmp.eq.s32.totalorder %s14, 0
    %p70 = por %p68, %p69
    %p71 = scmp.ne.s32.totalorder %s59, %s60
    %p72 = scmp.eq.s32.totalorder %s15, 1
    %p73 = por %p71, %p72
    %p75 = scmp.ne.s32.totalorder %s60, %s74
    %p76 = scmp.eq.s32.totalorder %s15, 0
    %p77 = por %p75, %p76
    %s79 = sadd.s32 %s78, 1
    %p82 = scmp.eq.s32.totalorder %s9, 1
    %p83 = scmp.ne.s32.totalorder %s78, %s80
    %p84 = scmp.eq.s32.totalorder %s9, 0
    %p85 = por %p83, %p84
    %p86 = scmp.ne.s32.totalorder %s78, %s80
    %p87 = scmp.eq.s32.totalorder %s14, 1
    %p88 = por %p86, %p87
    %p89 = scmp.ne.s32.totalorder %s80, %s81
    %p90 = scmp.eq.s32.totalorder %s14, 0
    %p91 = por %p89, %p90
    %p92 = scmp.ne.s32.totalorder %s80, %s81
    %p93 = scmp.eq.s32.totalorder %s15, 1
    %p94 = por %p92, %p93
    %p96 = scmp.ne.s32.totalorder %s81, %s95
    %p97 = scmp.eq.s32.totalorder %s15, 0
    %p98 = por %p96, %p97
    %s99 = ssub.s32 %s16, %s28
    %s100 = ssub.s32 %s17, %s24
    %s101 = sor.u32 %s99, %s100
    %p102 = scmp.eq.s32.totalorder %s101, 0
    %s104 = sadd.s32 %s103, 1
    %s105 = scalar_select %p102, %s103, %s104
    %p108 = pneg %p102
    %p109 = scmp.eq.s32.totalorder %s9, 1
    %p110 = por %p108, %p109
    %p111 = scmp.ne.s32.totalorder %s103, %s106
    %p112 = scmp.eq.s32.totalorder %s9, 0
    %p113 = por %p111, %p112
    %p114 = scmp.ne.s32.totalorder %s103, %s106
    %p115 = scmp.eq.s32.totalorder %s14, 1
    %p116 = por %p114, %p115
    %p117 = scmp.ne.s32.totalorder %s106, %s107
    %p118 = scmp.eq.s32.totalorder %s14, 0
    %p119 = por %p117, %p118
    %p120 = scmp.ne.s32.totalorder %s106, %s107
    %p121 = scmp.eq.s32.totalorder %s15, 1
    %p122 = por %p120, %p121
    %p124 = scmp.ne.s32.totalorder %s107, %s123
    %p125 = scmp.eq.s32.totalorder %s15, 0
    %p126 = por %p124, %p125
    %p127 = scmp.le.s32.totalorder 1, %s9
    %p128 = scmp.lt.s32.totalorder %s9, 3
    %p129 = pnand %p127, %p128
    %p130 = pneg %p129
    // Predicated region
    $region9: #{visual_head_new_forward.4} parent=5 // pred_check
      _
    $region10: #{visual_head_new_forward.4} parent=5 // pred_check_branch
      %132 = sbr.rel (%p129) target = $region12
    $region11: #{visual_head_new_forward.4} parent=5 // pred_region
      %s133 = ssub.s32 %s9, 1
      // Predicated region
      $region13: #{visual_head_new_forward.4} parent=11 // pred_check
        %p134 = pneg %p70
      $region14: #{visual_head_new_forward.4} parent=11 // pred_check_branch
        %136 = sbr.rel (%p134) target = $region16
      $region15: #{visual_head_new_forward.4} parent=11 // pred_region
        _
      $region16: #{visual_head_new_forward.4} parent=11 // pred_fallthru
        _
      // Predicated region
      $region17: #{visual_head_new_forward.4} parent=11 // pred_check
        %p137 = pneg %p91
      $region18: #{visual_head_new_forward.4} parent=11 // pred_check_branch
        %139 = sbr.rel (%p137) target = $region20
      $region19: #{visual_head_new_forward.4} parent=11 // pred_region
        _
      $region20: #{visual_head_new_forward.4} parent=11 // pred_fallthru
        _
    $region12: #{visual_head_new_forward.4} parent=5 // pred_fallthru
      _
    %p140 = scmp.lt.s32.totalorder %s9, 2
    // Predicated region
    $region21: #{visual_head_new_forward.4} parent=5 // pred_check
      %p141 = pneg %p140
    $region22: #{visual_head_new_forward.4} parent=5 // pred_check_branch
      %143 = sbr.rel (%p141) target = $region24
    $region23: #{visual_head_new_forward.4} parent=5 // pred_region
      // Predicated region
      $region25: #{visual_head_new_forward.4} parent=23 // pred_check
        %p144 = pneg %p43
      $region26: #{visual_head_new_forward.4} parent=23 // pred_check_branch
        %146 = sbr.rel (%p144) target = $region28
      $region27: #{visual_head_new_forward.4} parent=23 // pred_region
        %p147 = scmp.lt.s32.totalorder %s16, 1
        %s148 = scalar_select %p147, %s16, 1
        %p149 = scmp.lt.s32.totalorder %s17, 0
        %s150 = scalar_select %p149, %s17, 0
        %s151 = smul.addr %s150, 3
        %s152 = smul.addr %s148, 3
        %s153 = sadd.s32 %s151, %s152
        %s154 = smul.addr %s153, 8
        %s155 = scalar_lea.vmem %s0, %s154
      $region28: #{visual_head_new_forward.4} parent=23 // pred_fallthru
        _
    $region24: #{visual_head_new_forward.4} parent=5 // pred_fallthru
      _
    %p156 = scmp.le.s32.totalorder 1, %s9
    %p157 = scmp.lt.s32.totalorder %s9, 3
    %p158 = pnand %p156, %p157
    %p159 = pneg %p158
    // Predicated region
    $region29: #{visual_head_new_forward.4} parent=5 // pred_check
      _
    $region30: #{visual_head_new_forward.4} parent=5 // pred_check_branch
      %161 = sbr.rel (%p158) target = $region32
    $region31: #{visual_head_new_forward.4} parent=5 // pred_region
      %s162 = ssub.s32 %s9, 1
      %p163 = scmp.lt.s32.totalorder %s18, 1
      %s164 = scalar_select %p163, %s18, 1
      %p165 = scmp.lt.s32.totalorder %s19, 0
      %s166 = scalar_select %p165, %s19, 0
      %s167 = smul.addr %s166, 3
      %s168 = smul.addr %s164, 3
      %s169 = sadd.s32 %s167, %s168
      %s170 = smul.addr %s169, 8
      %s171 = scalar_lea.vmem %s0, %s170
      %p172 = pneg %p49
      %p173 = pneg %p46
      %p174 = pneg %p70
      %p175 = pneg %p67
      %p176 = pneg %p91
      %p177 = pneg %p88
      %p178 = pneg %p119
      %p179 = pneg %p116
      %s180 = smul.u32 2, %s19
      %p181 = scmp.lt.s32.totalorder %s18, 1
      %s182 = scalar_select %p181, %s18, 1
      %p183 = scmp.lt.s32.totalorder %s180, 1
      %s184 = scalar_select %p183, %s180, 1
      %s185 = smul.addr %s182, 2
      %s186 = sadd.s32 %s184, %s185
      %s187 = smul.addr %s186, 8
      %s188 = scalar_lea.vmem %s3, %s187
      %p189 = scmp.lt.s32.totalorder %s18, 1
      %s190 = scalar_select %p189, %s18, 1
      %p191 = scmp.lt.s32.totalorder %s19, 0
      %s192 = scalar_select %p191, %s19, 0
      %s193 = smul.addr %s192, 3
      %s194 = smul.addr %s190, 3
      %s195 = sadd.s32 %s193, %s194
      %s196 = smul.addr %s195, 8
      %s197 = scalar_lea.vmem %s0, %s196
      %s198 = smul.u32 2, %s19
      %p199 = scmp.lt.s32.totalorder %s18, 1
      %s200 = scalar_select %p199, %s18, 1
      %p201 = scmp.lt.s32.totalorder %s198, 1
      %s202 = scalar_select %p201, %s198, 1
      %s203 = smul.addr %s200, 2
      %s204 = sadd.s32 %s202, %s203
      %s205 = smul.addr %s204, 8
      %s206 = scalar_lea.vmem %s3, %s205
      %s207 = smul.u32 2, %s19
      %v208 = vld [vmem:[%s197] sm:$0xff]
      %v209 = vld [vmem:[%s197 + $0x8] sm:$0xff]
      %v210 = vld [vmem:[%s1] sm:$0xf]
      %v211 = vld [vmem:[%s197 + $0x1] sm:$0xff]
      %v212 = vld [vmem:[%s197 + $0x9] sm:$0xff]
      %s213 = scalar_lea.vmem %s1, 4
      %v214 = vld [vmem:[%s213] sm:$0xf]
      %vm215 = vcmask 31744
      %v217 = vsel %vm215, %v211, 0
      %v220 = vsel %vm215, %v212, 0
      %vm222 = vcmask 1043456
      %v224 = vsel %vm222, %v214, 0
      %226 = vmatprep.subr.mxu0 0.0
      %227 = vmatpush1.msra.mxu0 0.0
      %228 = vmatprep.subr.mxu0 0.0
      %229 = vmatpush1.msra.mxu0 0.0
      %230 = vmatprep.subr.mxu0 0.0
      %231 = vmatpush1.msra.mxu0 0.0
      %232 = vmatprep.subr.mxu0 0.0
      %233 = vmatpush1.msra.mxu0 0.0
      %234 = vmatprep.subr.mxu0 0.0
      %235 = vmatpush1.msra.mxu0 0.0
      %236 = vmatprep.subr.mxu0 0.0
      %237 = vmatpush1.msra.mxu0 0.0
      %238 = vmatprep.subr.mxu0 0.0
      %239 = vmatpush1.msra.mxu0 0.0
      %240 = vmatprep.subr.mxu0 0.0
      %241 = vmatpush1.msra.mxu0 0.0
      %242 = vmatprep.subr.mxu0 0.0
      %243 = vmatpush1.msra.mxu0 0.0
      %244 = vmatprep.subr.mxu0 0.0
      %245 = vmatpush1.msra.mxu0 0.0
      %246 = vmatprep.subr.mxu0 0.0
      %247 = vmatpush1.msra.mxu0 0.0
      %248 = vmatprep.subr.mxu0 0.0
      %249 = vmatpush1.msra.mxu0 0.0
      %250 = vmatprep.subr.mxu0 0.0
      %251 = vmatpush1.msra.mxu0 0.0
      %252 = vmatprep.subr.mxu0 0.0
      %253 = vmatpush1.msra.mxu0 0.0
      %254 = vmatprep.subr.mxu0 0.0
      %255 = vmatpush1.msra.mxu0 0.0
      %256 = vmatprep.subr.mxu0 0.0
      %257 = vmatpush1.msra.mxu0 %v224
      %258 = vmatprep.subr.mxu0 0.0
      %259 = vmatpush2.msra.mxu0 0.0
      %260 = vmatprep.subr.mxu0 0.0
      %261 = vmatpush2.msra.mxu0 0.0
      %262 = vmatprep.subr.mxu0 0.0
      %263 = vmatpush2.msra.mxu0 0.0
      %264 = vmatprep.subr.mxu0 0.0
      %265 = vmatpush2.msra.mxu0 0.0
      %266 = vmatprep.subr.mxu0 0.0
      %267 = vmatpush2.msra.mxu0 0.0
      %268 = vmatprep.subr.mxu0 0.0
      %269 = vmatpush2.msra.mxu0 0.0
      %270 = vmatprep.subr.mxu0 0.0
      %271 = vmatpush2.msra.mxu0 0.0
      %272 = vmatprep.subr.mxu0 0.0
      %273 = vmatpush2.msra.mxu0 0.0
      %274 = vmatprep.subr.mxu0 0.0
      %275 = vmatpush2.msra.mxu0 0.0
      %276 = vmatprep.subr.mxu0 0.0
      %277 = vmatpush2.msra.mxu0 0.0
      %278 = vmatprep.subr.mxu0 0.0
      %279 = vmatpush2.msra.mxu0 0.0
      %280 = vmatprep.subr.mxu0 0.0
      %281 = vmatpush2.msra.mxu0 0.0
      %282 = vmatprep.subr.mxu0 0.0
      %283 = vmatpush2.msra.mxu0 0.0
      %284 = vmatprep.subr.mxu0 0.0
      %285 = vmatpush2.msra.mxu0 0.0
      %286 = vmatprep.subr.mxu0 0.0
      %287 = vmatpush2.msra.mxu0 0.0
      %288 = vmatprep.subr.mxu0 0.0
      %289 = vmatpush2.msra.mxu0 0.0
      %290 = vmatprep.mubr.f32.mxu0 0.0
      %291 = vmatmul.mubr.f32.gmra.mxu0 %v217
      %v292 = vpop.f32.mrf.mxu0
      %v293 = vadd.f32 0.0, %v292
      %v294 = vpop.f32.mrf.mxu0
      %295 = vmatprep.mubr.f32.mxu0 0.0
      %296 = vmatmul.mubr.f32.gmra.mxu0 %v220
      %v297 = vpop.f32.mrf.mxu0
      %v298 = vadd.f32 0.0, %v297
      %v299 = vpop.f32.mrf.mxu0
      %300 = vdwg.mxu0
      %v302 = vsel %vm215, %v208, 0
      %v305 = vsel %vm215, %v209, 0
      %v308 = vsel %vm222, %v210, 0
      %310 = vmatprep.subr.mxu0 0.0
      %311 = vmatpush1.msra.mxu0 0.0
      %312 = vmatprep.subr.mxu0 0.0
      %313 = vmatpush1.msra.mxu0 0.0
      %314 = vmatprep.subr.mxu0 0.0
      %315 = vmatpush1.msra.mxu0 0.0
      %316 = vmatprep.subr.mxu0 0.0
      %317 = vmatpush1.msra.mxu0 0.0
      %318 = vmatprep.subr.mxu0 0.0
      %319 = vmatpush1.msra.mxu0 0.0
      %320 = vmatprep.subr.mxu0 0.0
      %321 = vmatpush1.msra.mxu0 0.0
      %322 = vmatprep.subr.mxu0 0.0
      %323 = vmatpush1.msra.mxu0 0.0
      %324 = vmatprep.subr.mxu0 0.0
      %325 = vmatpush1.msra.mxu0 0.0
      %326 = vmatprep.subr.mxu0 0.0
      %327 = vmatpush1.msra.mxu0 0.0
      %328 = vmatprep.subr.mxu0 0.0
      %329 = vmatpush1.msra.mxu0 0.0
      %330 = vmatprep.subr.mxu0 0.0
      %331 = vmatpush1.msra.mxu0 0.0
      %332 = vmatprep.subr.mxu0 0.0
      %333 = vmatpush1.msra.mxu0 0.0
      %334 = vmatprep.subr.mxu0 0.0
      %335 = vmatpush1.msra.mxu0 0.0
      %336 = vmatprep.subr.mxu0 0.0
      %337 = vmatpush1.msra.mxu0 0.0
      %338 = vmatprep.subr.mxu0 0.0
      %339 = vmatpush1.msra.mxu0 0.0
      %340 = vmatprep.subr.mxu0 0.0
      %341 = vmatpush1.msra.mxu0 %v308
      %342 = vmatprep.subr.mxu0 0.0
      %343 = vmatpush2.msra.mxu0 0.0
      %344 = vmatprep.subr.mxu0 0.0
      %345 = vmatpush2.msra.mxu0 0.0
      %346 = vmatprep.subr.mxu0 0.0
      %347 = vmatpush2.msra.mxu0 0.0
      %348 = vmatprep.subr.mxu0 0.0
      %349 = vmatpush2.msra.mxu0 0.0
      %350 = vmatprep.subr.mxu0 0.0
      %351 = vmatpush2.msra.mxu0 0.0
      %352 = vmatprep.subr.mxu0 0.0
      %353 = vmatpush2.msra.mxu0 0.0
      %354 = vmatprep.subr.mxu0 0.0
      %355 = vmatpush2.msra.mxu0 0.0
      %356 = vmatprep.subr.mxu0 0.0
      %357 = vmatpush2.msra.mxu0 0.0
      %358 = vmatprep.subr.mxu0 0.0
      %359 = vmatpush2.msra.mxu0 0.0
      %360 = vmatprep.subr.mxu0 0.0
      %361 = vmatpush2.msra.mxu0 0.0
      %362 = vmatprep.subr.mxu0 0.0
      %363 = vmatpush2.msra.mxu0 0.0
      %364 = vmatprep.subr.mxu0 0.0
      %365 = vmatpush2.msra.mxu0 0.0
      %366 = vmatprep.subr.mxu0 0.0
      %367 = vmatpush2.msra.mxu0 0.0
      %368 = vmatprep.subr.mxu0 0.0
      %369 = vmatpush2.msra.mxu0 0.0
      %370 = vmatprep.subr.mxu0 0.0
      %371 = vmatpush2.msra.mxu0 0.0
      %372 = vmatprep.subr.mxu0 0.0
      %373 = vmatpush2.msra.mxu0 0.0
      %374 = vmatprep.mubr.f32.mxu0 0.0
      %375 = vmatmul.mubr.f32.gmra.mxu0 %v302
      %v376 = vpop.f32.mrf.mxu0
      %v377 = vadd.f32 %v293, %v376
      %v378 = vpop.f32.mrf.mxu0
      %379 = vmatprep.mubr.f32.mxu0 0.0
      %380 = vmatmul.mubr.f32.gmra.mxu0 %v305
      %v381 = vpop.f32.mrf.mxu0
      %v382 = vadd.f32 %v298, %v381
      %v383 = vpop.f32.mrf.mxu0
      %384 = vdwg.mxu0
      %v385 = vld [vmem:[%s197 + $0x2] sm:$0xff]
      %v386 = vld [vmem:[%s197 + $0xa] sm:$0xff]
      %s387 = scalar_lea.vmem %s1, 8
      %v388 = vld [vmem:[%s387] sm:$0xf]
      %v390 = vsel %vm215, %v385, 0
      %v393 = vsel %vm215, %v386, 0
      %v396 = vsel %vm222, %v388, 0
      %398 = vmatprep.subr.mxu0 0.0
      %399 = vmatpush1.msra.mxu0 0.0
      %400 = vmatprep.subr.mxu0 0.0
      %401 = vmatpush1.msra.mxu0 0.0
      %402 = vmatprep.subr.mxu0 0.0
      %403 = vmatpush1.msra.mxu0 0.0
      %404 = vmatprep.subr.mxu0 0.0
      %405 = vmatpush1.msra.mxu0 0.0
      %406 = vmatprep.subr.mxu0 0.0
      %407 = vmatpush1.msra.mxu0 0.0
      %408 = vmatprep.subr.mxu0 0.0
      %409 = vmatpush1.msra.mxu0 0.0
      %410 = vmatprep.subr.mxu0 0.0
      %411 = vmatpush1.msra.mxu0 0.0
      %412 = vmatprep.subr.mxu0 0.0
      %413 = vmatpush1.msra.mxu0 0.0
      %414 = vmatprep.subr.mxu0 0.0
      %415 = vmatpush1.msra.mxu0 0.0
      %416 = vmatprep.subr.mxu0 0.0
      %417 = vmatpush1.msra.mxu0 0.0
      %418 = vmatprep.subr.mxu0 0.0
      %419 = vmatpush1.msra.mxu0 0.0
      %420 = vmatprep.subr.mxu0 0.0
      %421 = vmatpush1.msra.mxu0 0.0
      %422 = vmatprep.subr.mxu0 0.0
      %423 = vmatpush1.msra.mxu0 0.0
      %424 = vmatprep.subr.mxu0 0.0
      %425 = vmatpush1.msra.mxu0 0.0
      %426 = vmatprep.subr.mxu0 0.0
      %427 = vmatpush1.msra.mxu0 0.0
      %428 = vmatprep.subr.mxu0 0.0
      %429 = vmatpush1.msra.mxu0 %v396
      %430 = vmatprep.subr.mxu0 0.0
      %431 = vmatpush2.msra.mxu0 0.0
      %432 = vmatprep.subr.mxu0 0.0
      %433 = vmatpush2.msra.mxu0 0.0
      %434 = vmatprep.subr.mxu0 0.0
      %435 = vmatpush2.msra.mxu0 0.0
      %436 = vmatprep.subr.mxu0 0.0
      %437 = vmatpush2.msra.mxu0 0.0
      %438 = vmatprep.subr.mxu0 0.0
      %439 = vmatpush2.msra.mxu0 0.0
      %440 = vmatprep.subr.mxu0 0.0
      %441 = vmatpush2.msra.mxu0 0.0
      %442 = vmatprep.subr.mxu0 0.0
      %443 = vmatpush2.msra.mxu0 0.0
      %444 = vmatprep.subr.mxu0 0.0
      %445 = vmatpush2.msra.mxu0 0.0
      %446 = vmatprep.subr.mxu0 0.0
      %447 = vmatpush2.msra.mxu0 0.0
      %448 = vmatprep.subr.mxu0 0.0
      %449 = vmatpush2.msra.mxu0 0.0
      %450 = vmatprep.subr.mxu0 0.0
      %451 = vmatpush2.msra.mxu0 0.0
      %452 = vmatprep.subr.mxu0 0.0
      %453 = vmatpush2.msra.mxu0 0.0
      %454 = vmatprep.subr.mxu0 0.0
      %455 = vmatpush2.msra.mxu0 0.0
      %456 = vmatprep.subr.mxu0 0.0
      %457 = vmatpush2.msra.mxu0 0.0
      %458 = vmatprep.subr.mxu0 0.0
      %459 = vmatpush2.msra.mxu0 0.0
      %460 = vmatprep.subr.mxu0 0.0
      %461 = vmatpush2.msra.mxu0 0.0
      %462 = vmatprep.mubr.f32.mxu0 0.0
      %463 = vmatmul.mubr.f32.gmra.mxu0 %v390
      %v464 = vpop.f32.mrf.mxu0
      %v465 = vadd.f32 0.0, %v464
      %v466 = vpop.f32.mrf.mxu0
      %467 = vmatprep.mubr.f32.mxu0 0.0
      %468 = vmatmul.mubr.f32.gmra.mxu0 %v393
      %v469 = vpop.f32.mrf.mxu0
      %v470 = vadd.f32 0.0, %v469
      %v471 = vpop.f32.mrf.mxu0
      %472 = vdwg.mxu0
      %v473 = vadd.f32 %v377, %v465
      %v474 = vadd.f32 %v382, %v470
      %v475 = vld [vmem:[%s197 + $0x3] sm:$0xff]
      %v476 = vld [vmem:[%s197 + $0xb] sm:$0xff]
      %s477 = scalar_lea.vmem %s1, 12
      %v478 = vld [vmem:[%s477] sm:$0xf]
      %v480 = vsel %vm215, %v475, 0
      %v483 = vsel %vm215, %v476, 0
      %v486 = vsel %vm222, %v478, 0
      %488 = vmatprep.subr.mxu0 0.0
      %489 = vmatpush1.msra.mxu0 0.0
      %490 = vmatprep.subr.mxu0 0.0
      %491 = vmatpush1.msra.mxu0 0.0
      %492 = vmatprep.subr.mxu0 0.0
      %493 = vmatpush1.msra.mxu0 0.0
      %494 = vmatprep.subr.mxu0 0.0
      %495 = vmatpush1.msra.mxu0 0.0
      %496 = vmatprep.subr.mxu0 0.0
      %497 = vmatpush1.msra.mxu0 0.0
      %498 = vmatprep.subr.mxu0 0.0
      %499 = vmatpush1.msra.mxu0 0.0
      %500 = vmatprep.subr.mxu0 0.0
      %501 = vmatpush1.msra.mxu0 0.0
      %502 = vmatprep.subr.mxu0 0.0
      %503 = vmatpush1.msra.mxu0 0.0
      %504 = vmatprep.subr.mxu0 0.0
      %505 = vmatpush1.msra.mxu0 0.0
      %506 = vmatprep.subr.mxu0 0.0
      %507 = vmatpush1.msra.mxu0 0.0
      %508 = vmatprep.subr.mxu0 0.0
      %509 = vmatpush1.msra.mxu0 0.0
      %510 = vmatprep.subr.mxu0 0.0
      %511 = vmatpush1.msra.mxu0 0.0
      %512 = vmatprep.subr.mxu0 0.0
      %513 = vmatpush1.msra.mxu0 0.0
      %514 = vmatprep.subr.mxu0 0.0
      %515 = vmatpush1.msra.mxu0 0.0
      %516 = vmatprep.subr.mxu0 0.0
      %517 = vmatpush1.msra.mxu0 0.0
      %518 = vmatprep.subr.mxu0 0.0
      %519 = vmatpush1.msra.mxu0 %v486
      %520 = vmatprep.subr.mxu0 0.0
      %521 = vmatpush2.msra.mxu0 0.0
      %522 = vmatprep.subr.mxu0 0.0
      %523 = vmatpush2.msra.mxu0 0.0
      %524 = vmatprep.subr.mxu0 0.0
      %525 = vmatpush2.msra.mxu0 0.0
      %526 = vmatprep.subr.mxu0 0.0
      %527 = vmatpush2.msra.mxu0 0.0
      %528 = vmatprep.subr.mxu0 0.0
      %529 = vmatpush2.msra.mxu0 0.0
      %530 = vmatprep.subr.mxu0 0.0
      %531 = vmatpush2.msra.mxu0 0.0
      %532 = vmatprep.subr.mxu0 0.0
      %533 = vmatpush2.msra.mxu0 0.0
      %534 = vmatprep.subr.mxu0 0.0
      %535 = vmatpush2.msra.mxu0 0.0
      %536 = vmatprep.subr.mxu0 0.0
      %537 = vmatpush2.msra.mxu0 0.0
      %538 = vmatprep.subr.mxu0 0.0
      %539 = vmatpush2.msra.mxu0 0.0
      %540 = vmatprep.subr.mxu0 0.0
      %541 = vmatpush2.msra.mxu0 0.0
      %542 = vmatprep.subr.mxu0 0.0
      %543 = vmatpush2.msra.mxu0 0.0
      %544 = vmatprep.subr.mxu0 0.0
      %545 = vmatpush2.msra.mxu0 0.0
      %546 = vmatprep.subr.mxu0 0.0
      %547 = vmatpush2.msra.mxu0 0.0
      %548 = vmatprep.subr.mxu0 0.0
      %549 = vmatpush2.msra.mxu0 0.0
      %550 = vmatprep.subr.mxu0 0.0
      %551 = vmatpush2.msra.mxu0 0.0
      %552 = vmatprep.mubr.f32.mxu0 0.0
      %553 = vmatmul.mubr.f32.gmra.mxu0 %v480
      %v554 = vpop.f32.mrf.mxu0
      %v555 = vadd.f32 0.0, %v554
      %v556 = vpop.f32.mrf.mxu0
      %557 = vmatprep.mubr.f32.mxu0 0.0
      %558 = vmatmul.mubr.f32.gmra.mxu0 %v483
      %v559 = vpop.f32.mrf.mxu0
      %v560 = vadd.f32 0.0, %v559
      %v561 = vpop.f32.mrf.mxu0
      %562 = vdwg.mxu0
      %v563 = vadd.f32 %v473, %v555
      %v564 = vadd.f32 %v474, %v560
      %v565 = vld [vmem:[%s197 + $0x4] sm:$0xff]
      %v566 = vld [vmem:[%s197 + $0xc] sm:$0xff]
      %s567 = scalar_lea.vmem %s1, 16
      %v568 = vld [vmem:[%s567] sm:$0xf]
      %v570 = vsel %vm215, %v565, 0
      %v573 = vsel %vm215, %v566, 0
      %v576 = vsel %vm222, %v568, 0
      %578 = vmatprep.subr.mxu0 0.0
      %579 = vmatpush1.msra.mxu0 0.0
      %580 = vmatprep.subr.mxu0 0.0
      %581 = vmatpush1.msra.mxu0 0.0
      %582 = vmatprep.subr.mxu0 0.0
      %583 = vmatpush1.msra.mxu0 0.0
      %584 = vmatprep.subr.mxu0 0.0
      %585 = vmatpush1.msra.mxu0 0.0
      %586 = vmatprep.subr.mxu0 0.0
      %587 = vmatpush1.msra.mxu0 0.0
      %588 = vmatprep.subr.mxu0 0.0
      %589 = vmatpush1.msra.mxu0 0.0
      %590 = vmatprep.subr.mxu0 0.0
      %591 = vmatpush1.msra.mxu0 0.0
      %592 = vmatprep.subr.mxu0 0.0
      %593 = vmatpush1.msra.mxu0 0.0
      %594 = vmatprep.subr.mxu0 0.0
      %595 = vmatpush1.msra.mxu0 0.0
      %596 = vmatprep.subr.mxu0 0.0
      %597 = vmatpush1.msra.mxu0 0.0
      %598 = vmatprep.subr.mxu0 0.0
      %599 = vmatpush1.msra.mxu0 0.0
      %600 = vmatprep.subr.mxu0 0.0
      %601 = vmatpush1.msra.mxu0 0.0
      %602 = vmatprep.subr.mxu0 0.0
      %603 = vmatpush1.msra.mxu0 0.0
      %604 = vmatprep.subr.mxu0 0.0
      %605 = vmatpush1.msra.mxu0 0.0
      %606 = vmatprep.subr.mxu0 0.0
      %607 = vmatpush1.msra.mxu0 0.0
      %608 = vmatprep.subr.mxu0 0.0
      %609 = vmatpush1.msra.mxu0 %v576
      %610 = vmatprep.subr.mxu0 0.0
      %611 = vmatpush2.msra.mxu0 0.0
      %612 = vmatprep.subr.mxu0 0.0
      %613 = vmatpush2.msra.mxu0 0.0
      %614 = vmatprep.subr.mxu0 0.0
      %615 = vmatpush2.msra.mxu0 0.0
      %616 = vmatprep.subr.mxu0 0.0
      %617 = vmatpush2.msra.mxu0 0.0
      %618 = vmatprep.subr.mxu0 0.0
      %619 = vmatpush2.msra.mxu0 0.0
      %620 = vmatprep.subr.mxu0 0.0
      %621 = vmatpush2.msra.mxu0 0.0
      %622 = vmatprep.subr.mxu0 0.0
      %623 = vmatpush2.msra.mxu0 0.0
      %624 = vmatprep.subr.mxu0 0.0
      %625 = vmatpush2.msra.mxu0 0.0
      %626 = vmatprep.subr.mxu0 0.0
      %627 = vmatpush2.msra.mxu0 0.0
      %628 = vmatprep.subr.mxu0 0.0
      %629 = vmatpush2.msra.mxu0 0.0
      %630 = vmatprep.subr.mxu0 0.0
      %631 = vmatpush2.msra.mxu0 0.0
      %632 = vmatprep.subr.mxu0 0.0
      %633 = vmatpush2.msra.mxu0 0.0
      %634 = vmatprep.subr.mxu0 0.0
      %635 = vmatpush2.msra.mxu0 0.0
      %636 = vmatprep.subr.mxu0 0.0
      %637 = vmatpush2.msra.mxu0 0.0
      %638 = vmatprep.subr.mxu0 0.0
      %639 = vmatpush2.msra.mxu0 0.0
      %640 = vmatprep.subr.mxu0 0.0
      %641 = vmatpush2.msra.mxu0 0.0
      %642 = vmatprep.mubr.f32.mxu0 0.0
      %643 = vmatmul.mubr.f32.gmra.mxu0 %v570
      %v644 = vpop.f32.mrf.mxu0
      %v645 = vadd.f32 0.0, %v644
      %v646 = vpop.f32.mrf.mxu0
      %647 = vmatprep.mubr.f32.mxu0 0.0
      %648 = vmatmul.mubr.f32.gmra.mxu0 %v573
      %v649 = vpop.f32.mrf.mxu0
      %v650 = vadd.f32 0.0, %v649
      %v651 = vpop.f32.mrf.mxu0
      %652 = vdwg.mxu0
      %v653 = vadd.f32 %v563, %v645
      %v654 = vadd.f32 %v564, %v650
      %v655 = vld [vmem:[%s2] sm:$0x1]
      %v657 = vlaneseq
      %v658 = vshrl.u32 %v657, 7
      %v659 = vsub.s32 0, %v658
      %v660 = vrot.slane %v655, %v659
      %v662 = vadd.f32 %v653, %v660
      %v663 = vadd.f32 %v654, %v660
      %v664 = vmax.f32 %v662, 0.0
      %v665 = vmax.f32 %v663, 0.0
      %666 = vst [vmem:[%s206] sm:$0xff] %v664
      %667 = vst [vmem:[%s206 + $0x8] sm:$0xff] %v665
      %s668 = smul.u32 2, %s19
      %p669 = scmp.lt.s32.totalorder %s18, 1
      %s670 = scalar_select %p669, %s18, 1
      %p671 = scmp.lt.s32.totalorder %s668, 1
      %s672 = scalar_select %p671, %s668, 1
      %s673 = smul.addr %s670, 2
      %s674 = sadd.s32 %s672, %s673
      %s675 = smul.addr %s674, 8
      %s676 = scalar_lea.vmem %s3, %s675
      // Predicated region
      $region33: #{visual_head_new_forward.4} parent=31 // pred_check
        %p677 = pneg %p116
      $region34: #{visual_head_new_forward.4} parent=31 // pred_check_branch
        %679 = sbr.rel (%p677) target = $region36
      $region35: #{visual_head_new_forward.4} parent=31 // pred_region
        %s680 = smul.u32 2, %s19
      $region36: #{visual_head_new_forward.4} parent=31 // pred_fallthru
        _
    $region32: #{visual_head_new_forward.4} parent=5 // pred_fallthru
      _
    %p681 = scmp.le.s32.totalorder 2, %s9
    // Predicated region
    $region37: #{visual_head_new_forward.4} parent=5 // pred_check
      %p682 = pneg %p681
    $region38: #{visual_head_new_forward.4} parent=5 // pred_check_branch
      %684 = sbr.rel (%p682) target = $region40
    $region39: #{visual_head_new_forward.4} parent=5 // pred_region
      %s685 = ssub.s32 %s9, 2
      // Predicated region
      $region41: #{visual_head_new_forward.4} parent=39 // pred_check
        %p686 = pneg %p122
      $region42: #{visual_head_new_forward.4} parent=39 // pred_check_branch
        %688 = sbr.rel (%p686) target = $region44
      $region43: #{visual_head_new_forward.4} parent=39 // pred_region
        %s689 = smul.u32 2, %s21
        %p690 = scmp.lt.s32.totalorder %s20, 1
        %s691 = scalar_select %p690, %s20, 1
        %p692 = scmp.lt.s32.totalorder %s689, 1
        %s693 = scalar_select %p692, %s689, 1
        %s694 = smul.addr %s691, 2
        %s695 = sadd.s32 %s693, %s694
        %s696 = smul.addr %s695, 8
        %s697 = scalar_lea.vmem %s3, %s696
      $region44: #{visual_head_new_forward.4} parent=39 // pred_fallthru
        _
    $region40: #{visual_head_new_forward.4} parent=5 // pred_fallthru
      _
  $region6: #{visual_head_new_forward.4} parent=0 // loop_footer
    %s13 = sadd.s32 1, %s9
  $region7: #{visual_head_new_forward.4} parent=0 // loop_footer_branch
    %8 = sbr.rel target = $region3
  $region8: #{visual_head_new_forward.4} parent=0 // loop_exit
    _

// kernel: visual_head_new_forward.6
$region0: #{visual_head_new_forward.6}
  #allocation0 [shape = 'u32[]', space=smem, size = 0x4, offset = 0x4, fixed_abs, tag = 'smem constant byte address 0x4 - core index']
  #allocation1 [shape = 'u32[144,128]{1,0:T(1,128)}', space=vmem, size = 0x12000, scoped, tag = 'internal scratch']
  %s0 = inlined_call_operand.vmem [shape: f32[24,8], index: 0, kind: input, shape index: {}]
  %s1 = inlined_call_operand.vmem [shape: f32[8,128], index: 1, kind: input, shape index: {}]
  %s2 = inlined_call_operand.vmem [shape: f32[1,128], index: 2, kind: input, shape index: {}]
  %s3 = inlined_call_operand.vmem [shape: f32[24,128], index: 3, kind: output, shape index: {}]
  %s4 = sld [smem:[#allocation0]]
  $region22: #{visual_head_new_forward.6} parent=0
    _
  %s6 = ssub.s32 1, %s4
  %s7 = scalar_select 0, %s6, %s4
  // Predicated region
  $region2: #{visual_head_new_forward.6} parent=0 // pred_check
    _
  $region3: #{visual_head_new_forward.6} parent=0 // pred_check_branch
    %9 = sbr.rel (0) target = $region5
  $region4: #{visual_head_new_forward.6} parent=0 // pred_region
    _
  $region5: #{visual_head_new_forward.6} parent=0 // pred_fallthru
    _
  // Predicated region
  $region6: #{visual_head_new_forward.6} parent=0 // pred_check
    _
  $region7: #{visual_head_new_forward.6} parent=0 // pred_check_branch
    %11 = sbr.rel (0) target = $region9
  $region8: #{visual_head_new_forward.6} parent=0 // pred_region
    _
  $region9: #{visual_head_new_forward.6} parent=0 // pred_fallthru
    _
  // Predicated region
  $region10: #{visual_head_new_forward.6} parent=0 // pred_check
    _
  $region11: #{visual_head_new_forward.6} parent=0 // pred_check_branch
    %13 = sbr.rel (0) target = $region13
  $region12: #{visual_head_new_forward.6} parent=0 // pred_region
    _
  $region13: #{visual_head_new_forward.6} parent=0 // pred_fallthru
    _
  %v14 = vld [vmem:[%s0] sm:$0xff]
  %v15 = vld [vmem:[%s0 + $0x8] sm:$0xff]
  %v16 = vld [vmem:[%s0 + $0x10] sm:$0xff]
  %v17 = vld [vmem:[%s1] sm:$0xff]
  %v18 = vld [vmem:[%s2] sm:$0x1]
  %v20 = vlaneseq
  %v21 = vshrl.u32 %v20, 7
  %v22 = vsub.s32 0, %v21
  %v23 = vrot.slane %v18, %v22
  %vm25 = vcmask 64512
  %v27 = vsel %vm25, %v14, 0
  %v30 = vsel %vm25, %v15, 0
  %v33 = vsel %vm25, %v16, 0
  %35 = vmatprep.subr.mxu0 0.0
  %36 = vmatpush1.msra.mxu0 0.0
  %37 = vmatprep.subr.mxu0 0.0
  %38 = vmatpush1.msra.mxu0 0.0
  %39 = vmatprep.subr.mxu0 0.0
  %40 = vmatpush1.msra.mxu0 0.0
  %41 = vmatprep.subr.mxu0 0.0
  %42 = vmatpush1.msra.mxu0 0.0
  %43 = vmatprep.subr.mxu0 0.0
  %44 = vmatpush1.msra.mxu0 0.0
  %45 = vmatprep.subr.mxu0 0.0
  %46 = vmatpush1.msra.mxu0 0.0
  %47 = vmatprep.subr.mxu0 0.0
  %48 = vmatpush1.msra.mxu0 0.0
  %49 = vmatprep.subr.mxu0 0.0
  %50 = vmatpush1.msra.mxu0 0.0
  %51 = vmatprep.subr.mxu0 0.0
  %52 = vmatpush1.msra.mxu0 0.0
  %53 = vmatprep.subr.mxu0 0.0
  %54 = vmatpush1.msra.mxu0 0.0
  %55 = vmatprep.subr.mxu0 0.0
  %56 = vmatpush1.msra.mxu0 0.0
  %57 = vmatprep.subr.mxu0 0.0
  %58 = vmatpush1.msra.mxu0 0.0
  %59 = vmatprep.subr.mxu0 0.0
  %60 = vmatpush1.msra.mxu0 0.0
  %61 = vmatprep.subr.mxu0 0.0
  %62 = vmatpush1.msra.mxu0 0.0
  %63 = vmatprep.subr.mxu0 0.0
  %64 = vmatpush1.msra.mxu0 0.0
  %65 = vmatprep.subr.mxu0 0.0
  %66 = vmatpush1.msra.mxu0 %v17
  %67 = vmatprep.subr.mxu0 0.0
  %68 = vmatpush2.msra.mxu0 0.0
  %69 = vmatprep.subr.mxu0 0.0
  %70 = vmatpush2.msra.mxu0 0.0
  %71 = vmatprep.subr.mxu0 0.0
  %72 = vmatpush2.msra.mxu0 0.0
  %73 = vmatprep.subr.mxu0 0.0
  %74 = vmatpush2.msra.mxu0 0.0
  %75 = vmatprep.subr.mxu0 0.0
  %76 = vmatpush2.msra.mxu0 0.0
  %77 = vmatprep.subr.mxu0 0.0
  %78 = vmatpush2.msra.mxu0 0.0
  %79 = vmatprep.subr.mxu0 0.0
  %80 = vmatpush2.msra.mxu0 0.0
  %81 = vmatprep.subr.mxu0 0.0
  %82 = vmatpush2.msra.mxu0 0.0
  %83 = vmatprep.subr.mxu0 0.0
  %84 = vmatpush2.msra.mxu0 0.0
  %85 = vmatprep.subr.mxu0 0.0
  %86 = vmatpush2.msra.mxu0 0.0
  %87 = vmatprep.subr.mxu0 0.0
  %88 = vmatpush2.msra.mxu0 0.0
  %89 = vmatprep.subr.mxu0 0.0
  %90 = vmatpush2.msra.mxu0 0.0
  %91 = vmatprep.subr.mxu0 0.0
  %92 = vmatpush2.msra.mxu0 0.0
  %93 = vmatprep.subr.mxu0 0.0
  %94 = vmatpush2.msra.mxu0 0.0
  %95 = vmatprep.subr.mxu0 0.0
  %96 = vmatpush2.msra.mxu0 0.0
  %97 = vmatprep.subr.mxu0 0.0
  %98 = vmatpush2.msra.mxu0 0.0
  %99 = vmatprep.mubr.f32.mxu0 0.0
  %100 = vmatmul.mubr.f32.gmra.mxu0 %v27
  %v101 = vpop.f32.mrf.mxu0
  %v102 = vadd.f32 %v23, %v101
  %v103 = vpop.f32.mrf.mxu0
  %104 = vmatprep.mubr.f32.mxu0 0.0
  %105 = vmatmul.mubr.f32.gmra.mxu0 %v30
  %v106 = vpop.f32.mrf.mxu0
  %v107 = vadd.f32 %v23, %v106
  %v108 = vpop.f32.mrf.mxu0
  %109 = vmatprep.mubr.f32.mxu0 0.0
  %110 = vmatmul.mubr.f32.gmra.mxu0 %v33
  %v111 = vpop.f32.mrf.mxu0
  %v112 = vadd.f32 %v23, %v111
  %v113 = vpop.f32.mrf.mxu0
  %114 = vdwg.mxu0
  %v115 = vmax.f32 %v102, 0.0
  %v116 = vmax.f32 %v107, 0.0
  %v117 = vmax.f32 %v112, 0.0
  %118 = vst [vmem:[%s3] sm:$0xff] %v115
  %119 = vst [vmem:[%s3 + $0x8] sm:$0xff] %v116
  %120 = vst [vmem:[%s3 + $0x10] sm:$0xff] %v117
  // Predicated region
  $region14: #{visual_head_new_forward.6} parent=0 // pred_check
    _
  $region15: #{visual_head_new_forward.6} parent=0 // pred_check_branch
    %122 = sbr.rel (0) target = $region17
  $region16: #{visual_head_new_forward.6} parent=0 // pred_region
    _
  $region17: #{visual_head_new_forward.6} parent=0 // pred_fallthru
    _
  // Predicated region
  $region18: #{visual_head_new_forward.6} parent=0 // pred_check
    _
  $region19: #{visual_head_new_forward.6} parent=0 // pred_check_branch
    %124 = sbr.rel (0) target = $region21
  $region20: #{visual_head_new_forward.6} parent=0 // pred_region
    _
  $region21: #{visual_head_new_forward.6} parent=0 // pred_fallthru
    _

// kernel: visual_head_new_forward.7
$region0: #{visual_head_new_forward.7}
  #allocation0 [shape = 'u32[]', space=smem, size = 0x4, offset = 0x4, fixed_abs, tag = 'smem constant byte address 0x4 - core index']
  #allocation1 [shape = 'u32[144,128]{1,0:T(1,128)}', space=vmem, size = 0x12000, scoped, tag = 'internal scratch']
  %s0 = inlined_call_operand.vmem [shape: f32[24,32], index: 0, kind: input, shape index: {}]
  %s1 = inlined_call_operand.vmem [shape: f32[32,128], index: 1, kind: input, shape index: {}]
  %s2 = inlined_call_operand.vmem [shape: f32[1,128], index: 2, kind: input, shape index: {}]
  %s3 = inlined_call_operand.vmem [shape: f32[24,128], index: 3, kind: output, shape index: {0}]
  %s4 = inlined_call_operand.vmem [shape: f32[24,128], index: 4, kind: output, shape index: {1}]
  %s5 = inlined_call_operand.vmem [shape: f32[24,128], index: 5, kind: output, shape index: {2}]
  %6 = xla_tuple %s3, %s4, %s5
  %s7 = sld [smem:[#allocation0]]
  $region38: #{visual_head_new_forward.7} parent=0
    _
  %s9 = ssub.s32 1, %s7
  %s10 = scalar_select 0, %s9, %s7
  // Predicated region
  $region2: #{visual_head_new_forward.7} parent=0 // pred_check
    _
  $region3: #{visual_head_new_forward.7} parent=0 // pred_check_branch
    %12 = sbr.rel (0) target = $region5
  $region4: #{visual_head_new_forward.7} parent=0 // pred_region
    _
  $region5: #{visual_head_new_forward.7} parent=0 // pred_fallthru
    _
  // Predicated region
  $region6: #{visual_head_new_forward.7} parent=0 // pred_check
    _
  $region7: #{visual_head_new_forward.7} parent=0 // pred_check_branch
    %14 = sbr.rel (0) target = $region9
  $region8: #{visual_head_new_forward.7} parent=0 // pred_region
    _
  $region9: #{visual_head_new_forward.7} parent=0 // pred_fallthru
    _
  // Predicated region
  $region10: #{visual_head_new_forward.7} parent=0 // pred_check
    _
  $region11: #{visual_head_new_forward.7} parent=0 // pred_check_branch
    %16 = sbr.rel (0) target = $region13
  $region12: #{visual_head_new_forward.7} parent=0 // pred_region
    _
  $region13: #{visual_head_new_forward.7} parent=0 // pred_fallthru
    _
  %v17 = vld [vmem:[%s0] sm:$0xff]
  %v18 = vld [vmem:[%s0 + $0x8] sm:$0xff]
  %v19 = vld [vmem:[%s0 + $0x10] sm:$0xff]
  %v20 = vld [vmem:[%s1] sm:$0xff]
  %v21 = vld [vmem:[%s1 + $0x8] sm:$0xff]
  %v22 = vld [vmem:[%s1 + $0x10] sm:$0xff]
  %v23 = vld [vmem:[%s1 + $0x18] sm:$0xff]
  %v24 = vld [vmem:[%s2] sm:$0x1]
  %v26 = vlaneseq
  %v27 = vshrl.u32 %v26, 7
  %v28 = vsub.s32 0, %v27
  %v29 = vrot.slane %v24, %v28
  %vm31 = vcmask 261120
  %v33 = vsel %vm31, %v17, 0
  %v36 = vsel %vm31, %v18, 0
  %v39 = vsel %vm31, %v19, 0
  %41 = vmatprep.subr.mxu0 0.0
  %42 = vmatpush1.msra.mxu0 0.0
  %43 = vmatprep.subr.mxu0 0.0
  %44 = vmatpush1.msra.mxu0 0.0
  %45 = vmatprep.subr.mxu0 0.0
  %46 = vmatpush1.msra.mxu0 0.0
  %47 = vmatprep.subr.mxu0 0.0
  %48 = vmatpush1.msra.mxu0 0.0
  %49 = vmatprep.subr.mxu0 0.0
  %50 = vmatpush1.msra.mxu0 0.0
  %51 = vmatprep.subr.mxu0 0.0
  %52 = vmatpush1.msra.mxu0 0.0
  %53 = vmatprep.subr.mxu0 0.0
  %54 = vmatpush1.msra.mxu0 0.0
  %55 = vmatprep.subr.mxu0 0.0
  %56 = vmatpush1.msra.mxu0 0.0
  %57 = vmatprep.subr.mxu0 0.0
  %58 = vmatpush1.msra.mxu0 0.0
  %59 = vmatprep.subr.mxu0 0.0
  %60 = vmatpush1.msra.mxu0 0.0
  %61 = vmatprep.subr.mxu0 0.0
  %62 = vmatpush1.msra.mxu0 0.0
  %63 = vmatprep.subr.mxu0 0.0
  %64 = vmatpush1.msra.mxu0 0.0
  %65 = vmatprep.subr.mxu0 0.0
  %66 = vmatpush1.msra.mxu0 %v23
  %67 = vmatprep.subr.mxu0 0.0
  %68 = vmatpush1.msra.mxu0 %v22
  %69 = vmatprep.subr.mxu0 0.0
  %70 = vmatpush1.msra.mxu0 %v21
  %71 = vmatprep.subr.mxu0 0.0
  %72 = vmatpush1.msra.mxu0 %v20
  %73 = vmatprep.subr.mxu0 0.0
  %74 = vmatpush2.msra.mxu0 0.0
  %75 = vmatprep.subr.mxu0 0.0
  %76 = vmatpush2.msra.mxu0 0.0
  %77 = vmatprep.subr.mxu0 0.0
  %78 = vmatpush2.msra.mxu0 0.0
  %79 = vmatprep.subr.mxu0 0.0
  %80 = vmatpush2.msra.mxu0 0.0
  %81 = vmatprep.subr.mxu0 0.0
  %82 = vmatpush2.msra.mxu0 0.0
  %83 = vmatprep.subr.mxu0 0.0
  %84 = vmatpush2.msra.mxu0 0.0
  %85 = vmatprep.subr.mxu0 0.0
  %86 = vmatpush2.msra.mxu0 0.0
  %87 = vmatprep.subr.mxu0 0.0
  %88 = vmatpush2.msra.mxu0 0.0
  %89 = vmatprep.subr.mxu0 0.0
  %90 = vmatpush2.msra.mxu0 0.0
  %91 = vmatprep.subr.mxu0 0.0
  %92 = vmatpush2.msra.mxu0 0.0
  %93 = vmatprep.subr.mxu0 0.0
  %94 = vmatpush2.msra.mxu0 0.0
  %95 = vmatprep.subr.mxu0 0.0
  %96 = vmatpush2.msra.mxu0 0.0
  %97 = vmatprep.subr.mxu0 0.0
  %98 = vmatpush2.msra.mxu0 0.0
  %99 = vmatprep.subr.mxu0 0.0
  %100 = vmatpush2.msra.mxu0 0.0
  %101 = vmatprep.subr.mxu0 0.0
  %102 = vmatpush2.msra.mxu0 0.0
  %103 = vmatprep.subr.mxu0 0.0
  %104 = vmatpush2.msra.mxu0 0.0
  %105 = vmatprep.mubr.f32.mxu0 0.0
  %106 = vmatmul.mubr.f32.gmra.mxu0 %v33
  %v107 = vpop.f32.mrf.mxu0
  %v108 = vadd.f32 %v29, %v107
  %v109 = vpop.f32.mrf.mxu0
  %110 = vmatprep.mubr.f32.mxu0 0.0
  %111 = vmatmul.mubr.f32.gmra.mxu0 %v36
  %v112 = vpop.f32.mrf.mxu0
  %v113 = vadd.f32 %v29, %v112
  %v114 = vpop.f32.mrf.mxu0
  %115 = vmatprep.mubr.f32.mxu0 0.0
  %116 = vmatmul.mubr.f32.gmra.mxu0 %v39
  %v117 = vpop.f32.mrf.mxu0
  %v118 = vadd.f32 %v29, %v117
  %v119 = vpop.f32.mrf.mxu0
  %120 = vdwg.mxu0
  %v121 = vlaneseq
  %v122 = vand.u32 %v121, 127
  %vm123 = vcmp.lt.s32.totalorder %v122, 16
  %v124 = vsel %vm123, %v108, -1e+30
  %v125 = vsel %vm123, %v113, -1e+30
  %v126 = vsel %vm123, %v118, -1e+30
  %127 = vmax.xlane.f32.xlu0 %v124
  %v128 = vpop.xlane.xlu0 %127
  %129 = vmax.xlane.f32.xlu0 %v125
  %v130 = vpop.xlane.xlu0 %129
  %131 = vmax.xlane.f32.xlu0 %v126
  %v132 = vpop.xlane.xlu0 %131
  %v133 = vsub.f32 %v124, %v128
  %v134 = vsub.f32 %v125, %v130
  %v135 = vsub.f32 %v126, %v132
  %v136 = vmul.f32 %v133, 1.442695
  %v137 = vpow.pop %v136
  %v138 = vmul.f32 %v134, 1.442695
  %v139 = vpow.pop %v138
  %v140 = vmul.f32 %v135, 1.442695
  %v141 = vpow.pop %v140
  %142 = vadd.xlane.f32.xlu0 %v137
  %v143 = vpop.xlane.xlu0 %142
  %144 = vadd.xlane.f32.xlu0 %v139
  %v145 = vpop.xlane.xlu0 %144
  %146 = vadd.xlane.f32.xlu0 %v141
  %v147 = vpop.xlane.xlu0 %146
  %v148 = vlog2.pop %v143
  %v149 = vmul.f32 %v148, 0.6931472
  %v150 = vlog2.pop %v145
  %v151 = vmul.f32 %v150, 0.6931472
  %v152 = vlog2.pop %v147
  %v153 = vmul.f32 %v152, 0.6931472
  %v154 = vsub.f32 %v133, %v149
  %v155 = vsub.f32 %v134, %v151
  %v156 = vsub.f32 %v135, %v153
  %v157 = vrcp.pop %v143
  %v158 = vmul.f32 %v137, %v157
  %v159 = vrcp.pop %v145
  %v160 = vmul.f32 %v139, %v159
  %v161 = vrcp.pop %v147
  %v162 = vmul.f32 %v141, %v161
  %163 = vst [vmem:[%s3] sm:$0xff] %v108
  %164 = vst [vmem:[%s3 + $0x8] sm:$0xff] %v113
  %165 = vst [vmem:[%s3 + $0x10] sm:$0xff] %v118
  %166 = vst [vmem:[%s4] sm:$0xff] %v154
  %167 = vst [vmem:[%s4 + $0x8] sm:$0xff] %v155
  %168 = vst [vmem:[%s4 + $0x10] sm:$0xff] %v156
  %169 = vst [vmem:[%s5] sm:$0xff] %v158
  %170 = vst [vmem:[%s5 + $0x8] sm:$0xff] %v160
  %171 = vst [vmem:[%s5 + $0x10] sm:$0xff] %v162
  // Predicated region
  $region14: #{visual_head_new_forward.7} parent=0 // pred_check
    _
  $region15: #{visual_head_new_forward.7} parent=0 // pred_check_branch
    %173 = sbr.rel (0) target = $region17
  $region16: #{visual_head_new_forward.7} parent=0 // pred_region
    _
  $region17: #{visual_head_new_forward.7} parent=0 // pred_fallthru
    _
  // Predicated region
  $region18: #{visual_head_new_forward.7} parent=0 // pred_check
    _
  $region19: #{visual_head_new_forward.7} parent=0 // pred_check_branch
    %175 = sbr.rel (0) target = $region21
  $region20: #{visual_head_new_forward.7} parent=0 // pred_region
    _
  $region21: #{visual_head_new_forward.7} parent=0 // pred_fallthru
    _
  // Predicated region
  $region22: #{visual_head_new_forward.7} parent=0 // pred_check
    _
  $region23: #{visual_head_new_forward.7} parent=0 // pred_check_branch
    %177 = sbr.rel (0) target = $region25
  $region24: #{visual_head_new_forward.7} parent=0 // pred_region
    _
  $region25: #{visual_head_new_forward.7} parent=0 // pred_fallthru
    _
  // Predicated region
  $region26: #{visual_head_new_forward.7} parent=0 // pred_check
    _
  $region27: #{visual_head_new_forward.7} parent=0 // pred_check_branch
    %179 = sbr.rel (0) target = $region29
  $region28: #{visual_head_new_forward.7} parent=0 // pred_region
    _
  $region29: #{visual_head_new_forward.7} parent=0 // pred_fallthru
    _
  // Predicated region
  $region30: #{visual_head_new_forward.7} parent=0 // pred_check
    _
  $region31: #{visual_head_new_forward.7} parent=0 // pred_check_branch
    %181 = sbr.rel (0) target = $region33
  $region32: #{visual_head_new_forward.7} parent=0 // pred_region
    _
  $region33: #{visual_head_new_forward.7} parent=0 // pred_fallthru
    _
  // Predicated region
  $region34: #{visual_head_new_forward.7} parent=0 // pred_check
    _
  $region35: #{visual_head_new_forward.7} parent=0 // pred_check_branch
    %183 = sbr.rel (0) target = $region37
  $region36: #{visual_head_new_forward.7} parent=0 // pred_region
    _
  $region37: #{visual_head_new_forward.7} parent=0 // pred_fallthru
    _

</llo_original>
